<compile_context>
chip_gen: v7x
topology: tpu7x:2x2x1
jax: 0.10.0
libtpu: 0.0.40
codegen_flags: <defaults>
</compile_context>

<pallas_src>
import functools

import jax
import jax.numpy as jnp
from jax import lax
from jax.experimental import pallas as pl
from jax.experimental.pallas import tpu as pltpu


def _bf16_exp_ok():
    """bf16 EUP transcendentals exist on v6e / v7x; fall back to f32 elsewhere."""
    try:
        kind = jax.devices()[0].device_kind.lower()
    except Exception:
        return False
    return any(tag in kind for tag in ("v6", "v7", "7x"))


# ----------------------------------------------------------------------------
# Kernel 1: fused encoder projection + flash-style correlation / softmax / flow
#
# Layout (pixels on the lane axis everywhere):
#   xq/xs   : (B, C, Npix)    channels-first pixels
#   wq/ws   : (Dpad, C)       transposed 1x1-conv weights (Dpad = 128)
#   bq/bs   : (Dpad, 1)
#   coordsT : (8, Npix)       rows 0,1 = normalized (x, y), rest zero
#   out     : (B, 8, Npix)    sublane 0,1 = flow, sublane 2 = certainty
# Grid: (batch, Nq tiles, Ns tiles); online softmax accumulators in VMEM.
# ----------------------------------------------------------------------------
def _matcher_kernel(xq_ref, xs_ref, wq_ref, bq_ref, ws_ref, bs_ref,
                    coordsT_ref, out_ref, m_ref, l_ref, acc_ref, fq_ref,
                    *, exp_dtype):
    si = pl.program_id(2)

    def project_t(x, w_t, b_t):
        # x: (C, T) pixels-on-lanes; w_t: (Dpad, C); b_t: (Dpad, 1).
        # C == 3 -> VPU broadcast-FMAs (the MXU gains nothing at K = 3).
        acc = jnp.zeros((w_t.shape[0], x.shape[1]), jnp.float32)
        for c in range(x.shape[0]):                     # static loop, C == 3
            acc = acc + w_t[:, c:c + 1] * x[c:c + 1, :]
        return jnp.maximum(acc + b_t, 0.0)              # relu(s*z) = s*relu(z), s>0

    @pl.when(si == 0)
    def _():
        m_ref[...] = jnp.full(m_ref.shape, -jnp.inf, jnp.float32)
        l_ref[...] = jnp.zeros_like(l_ref)
        acc_ref[...] = jnp.zeros_like(acc_ref)
        # Query features are independent of the support tile: compute once per
        # q tile and keep the bf16 copy in scratch for every s step.
        fq_ref[...] = project_t(xq_ref[0], wq_ref[...],
                                bq_ref[...]).astype(jnp.bfloat16)

    fs_t = project_t(xs_ref[0], ws_ref[...], bs_ref[...])        # (Dpad, TS) f32

    # Correlation in transposed layout: (TS, TQ) = fs^T contracted with fq^T
    # over the feature axis; bf16 MXU inputs, f32 accumulation.
    corr_t = lax.dot_general(
        fs_t.astype(jnp.bfloat16), fq_ref[...],
        (((0,), (0,)), ((), ())), preferred_element_type=jnp.float32)

    # Flash-style online softmax over support tiles (reductions over sublanes).
    m_prev = m_ref[...]                                          # (1, TQ)
    m_new = jnp.maximum(m_prev, corr_t.max(axis=0, keepdims=True))
    alpha = jnp.exp(m_prev - m_new)                              # (1, TQ) f32
    p = jnp.exp((corr_t - m_new).astype(exp_dtype))              # (TS, TQ)
    l_ref[...] = alpha * l_ref[...] + p.astype(jnp.float32).sum(
        axis=0, keepdims=True)
    # flow accumulator: coords^T (8, TS) @ p (TS, TQ) -> (8, TQ); bf16 MXU.
    pv = lax.dot_general(
        coordsT_ref[...].astype(jnp.bfloat16), p.astype(jnp.bfloat16),
        (((1,), (0,)), ((), ())), preferred_element_type=jnp.float32)
    acc_ref[...] = alpha * acc_ref[...] + pv
    m_ref[...] = m_new

    @pl.when(si == pl.num_programs(2) - 1)
    def _():
        inv_l = pl.reciprocal(l_ref[...], approx=True)           # EUP vrcp
        slab = acc_ref[...] * inv_l                              # (8, TQ)
        sub = lax.broadcasted_iota(jnp.int32, slab.shape, 0)
        # sublane 2 carries the certainty (row-max logit); coords row 2 is zero.
        out_ref[0] = jnp.where(sub == 2, m_ref[...], slab)


def matcher_forward_fused(xq, xs, wq_t, bq_t, ws_t, bs_t, coordsT,
                          *, tile_q=128, tile_s=256, exp_dtype=None):
    b, c, npix = xq.shape
    dpad = wq_t.shape[0]
    tile_q = min(tile_q, npix)
    tile_s = min(tile_s, npix)
    assert npix % tile_q == 0 and npix % tile_s == 0
    if exp_dtype is None:
        exp_dtype = jnp.bfloat16 if _bf16_exp_ok() else jnp.float32
    kernel = functools.partial(_matcher_kernel, exp_dtype=exp_dtype)
    grid = (b, npix // tile_q, npix // tile_s)
    return pl.pallas_call(
        kernel,
        out_shape=jax.ShapeDtypeStruct((b, 8, npix), jnp.float32),
        grid=grid,
        in_specs=[
            pl.BlockSpec((1, c, tile_q), lambda bi, qi, si: (bi, 0, qi)),
            pl.BlockSpec((1, c, tile_s), lambda bi, qi, si: (bi, 0, si)),
            pl.BlockSpec((dpad, c), lambda bi, qi, si: (0, 0)),
            pl.BlockSpec((dpad, 1), lambda bi, qi, si: (0, 0)),
            pl.BlockSpec((dpad, c), lambda bi, qi, si: (0, 0)),
            pl.BlockSpec((dpad, 1), lambda bi, qi, si: (0, 0)),
            pl.BlockSpec((8, tile_s), lambda bi, qi, si: (0, si)),
        ],
        out_specs=pl.BlockSpec((1, 8, tile_q), lambda bi, qi, si: (bi, 0, qi)),
        scratch_shapes=[
            pltpu.VMEM((1, tile_q), jnp.float32),      # running max m
            pltpu.VMEM((1, tile_q), jnp.float32),      # running denom l
            pltpu.VMEM((8, tile_q), jnp.float32),      # flow/cert accumulator
            pltpu.VMEM((dpad, tile_q), jnp.bfloat16),  # cached query features
        ],
        compiler_params=pltpu.CompilerParams(
            dimension_semantics=("parallel", "parallel", "arbitrary"),
            vmem_limit_bytes=32 * 1024 * 1024),
    )(xq, xs, wq_t, bq_t, ws_t, bs_t, coordsT)


# ----------------------------------------------------------------------------
# Kernel 2: fast_kde — density[i] = sum_j exp(-||x_i - x_j||^2 / (2 std^2))
# Tiled over i (parallel) and j (reduction) grid axes; squared norms are
# precomputed in the wrapper; partial sums accumulate lane-dense on the VPU.
# ----------------------------------------------------------------------------
def _kde_kernel(xi_ref, xj_ref, xin_ref, xjn_ref, dens_ref, acc_ref,
                *, neg_inv_two_sigma2, exp_dtype):
    j = pl.program_id(1)

    @pl.when(j == 0)
    def _():
        acc_ref[...] = jnp.zeros_like(acc_ref)

    dotp = lax.dot_general(xi_ref[...], xj_ref[...], (((1,), (1,)), ((), ())),
                           preferred_element_type=jnp.float32)        # (TI, TJ)
    d2 = jnp.maximum(xin_ref[...] + xjn_ref[...] - 2.0 * dotp, 0.0)
    # constant multiply (folded -1/(2 sigma^2)); bf16 exp on v6e/v7x, f32 on v5e
    w = jnp.exp((d2 * neg_inv_two_sigma2).astype(exp_dtype))          # (TI, TJ)

    # Lane-dense accumulation: fold TJ lanes into 128-wide chunks with VPU adds
    # (static, 128-aligned slices); the single cross-lane (XLU) reduce only
    # happens once, at the last j step.
    tj = w.shape[1]
    partial = w[:, 0:128].astype(jnp.float32)
    for k in range(1, tj // 128):
        partial = partial + w[:, k * 128:(k + 1) * 128].astype(jnp.float32)
    acc_ref[...] += partial

    @pl.when(j == pl.num_programs(1) - 1)
    def _():
        dens_ref[...] = acc_ref[...].sum(axis=-1, keepdims=True)


_KDE_PAD_VALUE = 1.0e4   # far-away sentinel row; its Gaussian weight underflows to 0


def _pad_rows(a, multiple, value):
    rem = a.shape[0] % multiple
    if rem == 0:
        return a
    filler = jnp.full((multiple - rem, a.shape[1]), value, a.dtype)
    return jnp.concatenate([a, filler], axis=0)


def fast_kde(x, std=0.1, half=True, down=None, *, tile_i=None, tile_j=None,
             exp_dtype=None):
    # x: (N, d) matches.
    # TODO(synk): torch `.half()` is fp16; the TPU MXU is bf16-native so bf16 is
    # used here (results will not bit-match an fp16 torch reference).
    x = jnp.asarray(x)
    n, d = x.shape
    x2 = x[::down] if down is not None else x
    n2 = x2.shape[0]
    # small-N -> small tiles (>= 2 parallel i tiles for v7x); large-N -> big
    # tiles to amortize the ~0.35us per-grid-step overhead.
    if tile_i is None:
        tile_i = 128 if n <= 2048 else 512
    if tile_j is None:
        tile_j = 256 if n2 <= 2048 else 1024
    assert tile_j % 128 == 0
    dtype = jnp.bfloat16 if half else jnp.float32
    if exp_dtype is None:
        exp_dtype = jnp.bfloat16 if (half and _bf16_exp_ok()) else jnp.float32

    xp = _pad_rows(x.astype(dtype), tile_i, _KDE_PAD_VALUE)
    x2p = _pad_rows(x2.astype(dtype), tile_j, _KDE_PAD_VALUE)
    # squared norms hoisted out of the kernel, computed from the same rounded
    # values the in-kernel bf16 MXU dot sees (keeps d2 >= ~0; clamp guards rest)
    xi_n = jnp.sum(xp.astype(jnp.float32) ** 2, axis=1, keepdims=True)      # (Ni, 1)
    xj_n = jnp.sum(x2p.astype(jnp.float32) ** 2, axis=1, keepdims=True).T   # (1, Nj)

    ni = xp.shape[0] // tile_i
    nj = x2p.shape[0] // tile_j
    neg_inv = -1.0 / (2.0 * float(std) * float(std))
    kernel = functools.partial(_kde_kernel, neg_inv_two_sigma2=neg_inv,
                               exp_dtype=exp_dtype)
    dens = pl.pallas_call(
        kernel,
        out_shape=jax.ShapeDtypeStruct((xp.shape[0], 1), jnp.float32),
        grid=(ni, nj),
        in_specs=[
            pl.BlockSpec((tile_i, d), lambda i, j: (i, 0)),
            pl.BlockSpec((tile_j, d), lambda i, j: (j, 0)),
            pl.BlockSpec((tile_i, 1), lambda i, j: (i, 0)),
            pl.BlockSpec((1, tile_j), lambda i, j: (0, j)),
        ],
        out_specs=pl.BlockSpec((tile_i, 1), lambda i, j: (i, 0)),
        scratch_shapes=[pltpu.VMEM((tile_i, 128), jnp.float32)],
        compiler_params=pltpu.CompilerParams(
            dimension_semantics=("parallel", "arbitrary"),
            vmem_limit_bytes=32 * 1024 * 1024),
    )(xp, x2p, xi_n, xj_n)
    return dens[:n, 0]


# ----------------------------------------------------------------------------
# RegressionMatcher forward (JAX glue around the fused Pallas kernel)
# ----------------------------------------------------------------------------
class RegressionMatcherPallas:
    DPAD = 128   # feature dim padded to a full MXU contraction width

    def __init__(self, cin=3, feat_dim=32, h=16, w=16, seed=0,
                 sample_mode="threshold_balanced"):
        # TODO(synk): encoder/decoder are injected nn.Modules in the original;
        # deterministic 1x1-conv + correlation/softmax stand-ins are used here.
        self.h, self.w = h, w
        self.feat_dim = feat_dim
        self.sample_mode = sample_mode
        k = jax.random.PRNGKey(seed)
        kw, kb = jax.random.split(k)
        w_true = (jax.random.normal(kw, (cin, feat_dim), jnp.float32)
                  * (1.0 / cin ** 0.5))
        b_true = jax.random.normal(kb, (1, feat_dim), jnp.float32) * 0.01
        # store transposed + zero-padded to DPAD feature rows (padded rows stay
        # exactly 0 after ReLU and contribute nothing to the correlation).
        w_pad_t = (jnp.zeros((self.DPAD, cin), jnp.float32)
                   .at[:feat_dim, :].set(w_true.T))
        b_pad_t = (jnp.zeros((self.DPAD, 1), jnp.float32)
                   .at[:feat_dim, :].set(b_true.T))
        # fold the 1/sqrt(D) softmax scale into the query-side parameters
        scale = 1.0 / float(feat_dim) ** 0.5
        self.wq_t, self.bq_t = w_pad_t * scale, b_pad_t * scale
        self.ws_t, self.bs_t = w_pad_t, b_pad_t
        # normalized support coordinates, (x, y) convention, transposed to
        # (8, HW): rows 0,1 = coords, rows 2..7 zero (row 2 later holds cert).
        ys = jnp.linspace(-1 + 1 / h, 1 - 1 / h, h)
        xs = jnp.linspace(-1 + 1 / w, 1 - 1 / w, w)
        gy, gx = jnp.meshgrid(ys, xs, indexing="ij")
        coords_t = jnp.stack([gx.reshape(-1), gy.reshape(-1)], axis=0)  # (2, HW)
        self.coordsT = (jnp.zeros((8, h * w), jnp.float32)
                        .at[0:2, :].set(coords_t.astype(jnp.float32)))

    def forward(self, batch, batched=True, upsample=False, scale_factor=1):
        # The synthetic encoder is per-pixel, so batched / non-batched paths of
        # the original module produce identical results; one fused kernel call.
        x_q = batch["im_A"]          # (B, 3, H, W) -- PyTorch NCHW input
        x_s = batch["im_B"]
        b, c, h, w = x_q.shape
        npix = h * w
        xq = x_q.reshape(b, c, npix)     # channels-first, pixels on lanes
        xs = x_s.reshape(b, c, npix)
        slab = matcher_forward_fused(xq, xs, self.wq_t, self.bq_t,
                                     self.ws_t, self.bs_t, self.coordsT)
        flow_nchw = slab[:, 0:2, :].reshape(b, 2, h, w)
        cert_nchw = slab[:, 2:3, :].reshape(b, 1, h, w)
        # corresps pyramid keyed by scale, finest_scale = 1 (as in match())
        return {1: {"flow": flow_nchw, "certainty": cert_nchw}}

    def fast_kde(self, x, std=0.1, half=True, down=None):
        return fast_kde(x, std=std, half=half, down=down)

    # TODO(synk): torch.multinomial-based sampling in `sample()` has no clean
    # Pallas equivalent; only the KDE hot path is implemented as a kernel.


if __name__ == "__main__":
    key = jax.random.PRNGKey(0)
    k1, k2, k3 = jax.random.split(key, 3)

    B, C, H, W = 2, 3, 16, 16
    im_A = jax.random.normal(k1, (B, C, H, W), jnp.float32)
    im_B = jax.random.normal(k2, (B, C, H, W), jnp.float32)

    matcher = RegressionMatcherPallas(cin=C, feat_dim=32, h=H, w=W, seed=0)
    corresps = matcher.forward({"im_A": im_A, "im_B": im_B}, batched=True)
    flow = jax.block_until_ready(corresps[1]["flow"])
    cert = jax.block_until_ready(corresps[1]["certainty"])
    assert flow.shape == (B, 2, H, W)
    assert cert.shape == (B, 1, H, W)

    # pure-JAX reference for the fused encoder+decoder kernel
    def ref_forward(im_q, im_s):
        b = im_q.shape[0]
        xq = jnp.transpose(im_q, (0, 2, 3, 1)).reshape(b, H * W, C)
        xs = jnp.transpose(im_s, (0, 2, 3, 1)).reshape(b, H * W, C)
        fq = jnp.maximum(xq @ matcher.wq_t.T + matcher.bq_t.T, 0.0)
        fs = jnp.maximum(xs @ matcher.ws_t.T + matcher.bs_t.T, 0.0)
        fq = fq.astype(jnp.bfloat16).astype(jnp.float32)
        fs = fs.astype(jnp.bfloat16).astype(jnp.float32)
        corr = jnp.einsum("bqd,bkd->bqk", fq, fs)
        m = corr.max(-1, keepdims=True)
        attn = jax.nn.softmax(corr, axis=-1)
        coords = matcher.coordsT[:2, :].T                    # (HW, 2)
        flow_r = jnp.einsum("bqk,kd->bqd", attn, coords)
        return flow_r, m

    flow_r, cert_r = ref_forward(im_A, im_B)
    flow_r = jnp.transpose(flow_r.reshape(B, H, W, 2), (0, 3, 1, 2))
    cert_r = jnp.transpose(cert_r.reshape(B, H, W, 1), (0, 3, 1, 2))
    assert jnp.allclose(flow, flow_r, rtol=2e-2, atol=2e-2)
    assert jnp.allclose(cert, cert_r, rtol=2e-2, atol=2e-2)

    # fast_kde hot path on synthetic match coordinates (N, 4)
    matches = jax.random.uniform(k3, (256, 4), jnp.float32, -1.0, 1.0)
    density = jax.block_until_ready(fast_kde(matches, std=0.1, half=True))
    assert density.shape == (256,)

    # lightweight reference check for the KDE kernel
    xm = matches.astype(jnp.bfloat16).astype(jnp.float32)
    d2 = ((xm[:, None, :] - xm[None, :, :]) ** 2).sum(-1)
    ref = jnp.exp(-d2 / (2 * 0.1 ** 2)).sum(-1)
    assert jnp.allclose(density, ref, rtol=1e-2, atol=1e-2)

    print("KERNEL_OK")
</pallas_src>

<mosaic_0001>
module attributes {stable_mosaic.version = 11 : i64} {
  func.func @_matcher_kernel(%arg0: i32, %arg1: i32, %arg2: i32, %arg3: memref<1x3x128xf32, #tpu.memory_space<vmem>>, %arg4: memref<1x3x256xf32, #tpu.memory_space<vmem>>, %arg5: memref<128x3xf32, #tpu.memory_space<vmem>>, %arg6: memref<128x1xf32, #tpu.memory_space<vmem>>, %arg7: memref<128x3xf32, #tpu.memory_space<vmem>>, %arg8: memref<128x1xf32, #tpu.memory_space<vmem>>, %arg9: memref<8x256xf32, #tpu.memory_space<vmem>>, %arg10: memref<1x8x128xf32, #tpu.memory_space<vmem>>, %arg11: memref<1x128xf32, #tpu.memory_space<vmem>>, %arg12: memref<1x128xf32, #tpu.memory_space<vmem>>, %arg13: memref<8x128xf32, #tpu.memory_space<vmem>>, %arg14: memref<128x128xbf16, #tpu.memory_space<vmem>>) attributes {dimension_semantics = [#tpu.dimension_semantics<parallel>, #tpu.dimension_semantics<parallel>, #tpu.dimension_semantics<arbitrary>], iteration_bounds = array<i64: 2, 2, 1>, scalar_prefetch = 0 : i64, scratch_operands = 4 : i64, tpu.core_type = #tpu.core_type<tc>, window_params = [{transform_indices = @transform_0, window_bounds = array<i64: 1, 3, 128>}, {transform_indices = @transform_1, window_bounds = array<i64: 1, 3, 256>}, {pipeline_mode = #tpu.pipeline_mode<synchronous>, transform_indices = @transform_2, window_bounds = array<i64: 128, 3>}, {pipeline_mode = #tpu.pipeline_mode<synchronous>, transform_indices = @transform_3, window_bounds = array<i64: 128, 1>}, {pipeline_mode = #tpu.pipeline_mode<synchronous>, transform_indices = @transform_4, window_bounds = array<i64: 128, 3>}, {pipeline_mode = #tpu.pipeline_mode<synchronous>, transform_indices = @transform_5, window_bounds = array<i64: 128, 1>}, {transform_indices = @transform_6, window_bounds = array<i64: 8, 256>}, {transform_indices = @transform_7, window_bounds = array<i64: 1, 8, 128>}]} {
    %c0_i32 = arith.constant 0 : i32
    %0 = arith.cmpi eq, %arg2, %c0_i32 : i32
    %1 = arith.extui %0 : i1 to i32
    %c0_i32_0 = arith.constant 0 : i32
    %2 = arith.cmpi ne, %1, %c0_i32_0 : i32
    scf.if %2 {
      %cst_30 = arith.constant 0xFF800000 : f32
      %61 = vector.broadcast %cst_30 : f32 to vector<1x128xf32>
      %c0_31 = arith.constant 0 : index
      %c0_32 = arith.constant 0 : index
      %62 = vector.load %arg11[%c0_31, %c0_32] : memref<1x128xf32, #tpu.memory_space<vmem>>, vector<1x128xf32>
      tpu.vector_store %arg11[%c0_31, %c0_32], %61 {strides = array<i32>} : memref<1x128xf32, #tpu.memory_space<vmem>>, vector<1x128xf32>,
      %cst_33 = arith.constant 0.000000e+00 : f32
      %63 = vector.broadcast %cst_33 : f32 to vector<1x128xf32>
      %c0_34 = arith.constant 0 : index
      %c0_35 = arith.constant 0 : index
      %64 = vector.load %arg12[%c0_34, %c0_35] : memref<1x128xf32, #tpu.memory_space<vmem>>, vector<1x128xf32>
      tpu.vector_store %arg12[%c0_34, %c0_35], %63 {strides = array<i32>} : memref<1x128xf32, #tpu.memory_space<vmem>>, vector<1x128xf32>,
      %cst_36 = arith.constant 0.000000e+00 : f32
      %65 = vector.broadcast %cst_36 : f32 to vector<8x128xf32>
      %c0_37 = arith.constant 0 : index
      %c0_38 = arith.constant 0 : index
      %66 = vector.load %arg13[%c0_37, %c0_38] : memref<8x128xf32, #tpu.memory_space<vmem>>, vector<8x128xf32>
      tpu.vector_store %arg13[%c0_37, %c0_38], %65 {strides = array<i32>} : memref<8x128xf32, #tpu.memory_space<vmem>>, vector<8x128xf32>,
      %c0_39 = arith.constant 0 : index
      %c0_40 = arith.constant 0 : index
      %c0_41 = arith.constant 0 : index
      %67 = vector.load %arg3[%c0_39, %c0_40, %c0_41] : memref<1x3x128xf32, #tpu.memory_space<vmem>>, vector<1x3x128xf32>
      %68 = vector.shape_cast %67 : vector<1x3x128xf32> to vector<3x128xf32>
      %c0_42 = arith.constant 0 : index
      %c0_43 = arith.constant 0 : index
      %69 = vector.load %arg5[%c0_42, %c0_43] : memref<128x3xf32, #tpu.memory_space<vmem>>, vector<128x3xf32>
      %c0_44 = arith.constant 0 : index
      %c0_45 = arith.constant 0 : index
      %70 = vector.load %arg6[%c0_44, %c0_45] : memref<128x1xf32, #tpu.memory_space<vmem>>, vector<128x1xf32>
      %cst_46 = arith.constant 0.000000e+00 : f32
      %71 = vector.broadcast %cst_46 : f32 to vector<128x128xf32>
      %72 = vector.extract_strided_slice %69 {offsets = [0, 0], sizes = [128, 1], strides = [1, 1]} : vector<128x3xf32> to vector<128x1xf32>
      %73 = vector.extract_strided_slice %68 {offsets = [0, 0], sizes = [1, 128], strides = [1, 1]} : vector<3x128xf32> to vector<1x128xf32>
      %74 = vector.broadcast %72 : vector<128x1xf32> to vector<128x128xf32>
      %75 = vector.broadcast %73 : vector<1x128xf32> to vector<128x128xf32>
      %76 = arith.mulf %74, %75 : vector<128x128xf32>
      %77 = arith.addf %71, %76 : vector<128x128xf32>
      %78 = vector.extract_strided_slice %69 {offsets = [0, 1], sizes = [128, 1], strides = [1, 1]} : vector<128x3xf32> to vector<128x1xf32>
      %79 = vector.extract_strided_slice %68 {offsets = [1, 0], sizes = [1, 128], strides = [1, 1]} : vector<3x128xf32> to vector<1x128xf32>
      %80 = vector.broadcast %78 : vector<128x1xf32> to vector<128x128xf32>
      %81 = vector.broadcast %79 : vector<1x128xf32> to vector<128x128xf32>
      %82 = arith.mulf %80, %81 : vector<128x128xf32>
      %83 = arith.addf %77, %82 : vector<128x128xf32>
      %84 = vector.extract_strided_slice %69 {offsets = [0, 2], sizes = [128, 1], strides = [1, 1]} : vector<128x3xf32> to vector<128x1xf32>
      %85 = vector.extract_strided_slice %68 {offsets = [2, 0], sizes = [1, 128], strides = [1, 1]} : vector<3x128xf32> to vector<1x128xf32>
      %86 = vector.broadcast %84 : vector<128x1xf32> to vector<128x128xf32>
      %87 = vector.broadcast %85 : vector<1x128xf32> to vector<128x128xf32>
      %88 = arith.mulf %86, %87 : vector<128x128xf32>
      %89 = arith.addf %83, %88 : vector<128x128xf32>
      %90 = vector.broadcast %70 : vector<128x1xf32> to vector<128x128xf32>
      %91 = arith.addf %89, %90 : vector<128x128xf32>
      %cst_47 = arith.constant 0.000000e+00 : f32
      %92 = vector.broadcast %cst_47 : f32 to vector<128x128xf32>
      %93 = arith.maximumf %91, %92 : vector<128x128xf32>
      %94 = arith.truncf %93 : vector<128x128xf32> to vector<128x128xbf16>
      %c0_48 = arith.constant 0 : index
      %c0_49 = arith.constant 0 : index
      %95 = vector.load %arg14[%c0_48, %c0_49] : memref<128x128xbf16, #tpu.memory_space<vmem>>, vector<128x128xbf16>
      tpu.vector_store %arg14[%c0_48, %c0_49], %94 {strides = array<i32>} : memref<128x128xbf16, #tpu.memory_space<vmem>>, vector<128x128xbf16>,
    } else {
    }
    %c0 = arith.constant 0 : index
    %c0_1 = arith.constant 0 : index
    %c0_2 = arith.constant 0 : index
    %3 = vector.load %arg4[%c0, %c0_1, %c0_2] : memref<1x3x256xf32, #tpu.memory_space<vmem>>, vector<1x3x256xf32>
    %4 = vector.shape_cast %3 : vector<1x3x256xf32> to vector<3x256xf32>
    %c0_3 = arith.constant 0 : index
    %c0_4 = arith.constant 0 : index
    %5 = vector.load %arg7[%c0_3, %c0_4] : memref<128x3xf32, #tpu.memory_space<vmem>>, vector<128x3xf32>
    %c0_5 = arith.constant 0 : index
    %c0_6 = arith.constant 0 : index
    %6 = vector.load %arg8[%c0_5, %c0_6] : memref<128x1xf32, #tpu.memory_space<vmem>>, vector<128x1xf32>
    %cst = arith.constant 0.000000e+00 : f32
    %7 = vector.broadcast %cst : f32 to vector<128x256xf32>
    %8 = vector.extract_strided_slice %5 {offsets = [0, 0], sizes = [128, 1], strides = [1, 1]} : vector<128x3xf32> to vector<128x1xf32>
    %9 = vector.extract_strided_slice %4 {offsets = [0, 0], sizes = [1, 256], strides = [1, 1]} : vector<3x256xf32> to vector<1x256xf32>
    %10 = vector.broadcast %8 : vector<128x1xf32> to vector<128x256xf32>
    %11 = vector.broadcast %9 : vector<1x256xf32> to vector<128x256xf32>
    %12 = arith.mulf %10, %11 : vector<128x256xf32>
    %13 = arith.addf %7, %12 : vector<128x256xf32>
    %14 = vector.extract_strided_slice %5 {offsets = [0, 1], sizes = [128, 1], strides = [1, 1]} : vector<128x3xf32> to vector<128x1xf32>
    %15 = vector.extract_strided_slice %4 {offsets = [1, 0], sizes = [1, 256], strides = [1, 1]} : vector<3x256xf32> to vector<1x256xf32>
    %16 = vector.broadcast %14 : vector<128x1xf32> to vector<128x256xf32>
    %17 = vector.broadcast %15 : vector<1x256xf32> to vector<128x256xf32>
    %18 = arith.mulf %16, %17 : vector<128x256xf32>
    %19 = arith.addf %13, %18 : vector<128x256xf32>
    %20 = vector.extract_strided_slice %5 {offsets = [0, 2], sizes = [128, 1], strides = [1, 1]} : vector<128x3xf32> to vector<128x1xf32>
    %21 = vector.extract_strided_slice %4 {offsets = [2, 0], sizes = [1, 256], strides = [1, 1]} : vector<3x256xf32> to vector<1x256xf32>
    %22 = vector.broadcast %20 : vector<128x1xf32> to vector<128x256xf32>
    %23 = vector.broadcast %21 : vector<1x256xf32> to vector<128x256xf32>
    %24 = arith.mulf %22, %23 : vector<128x256xf32>
    %25 = arith.addf %19, %24 : vector<128x256xf32>
    %26 = vector.broadcast %6 : vector<128x1xf32> to vector<128x256xf32>
    %27 = arith.addf %25, %26 : vector<128x256xf32>
    %cst_7 = arith.constant 0.000000e+00 : f32
    %28 = vector.broadcast %cst_7 : f32 to vector<128x256xf32>
    %29 = arith.maximumf %27, %28 : vector<128x256xf32>
    %30 = arith.truncf %29 : vector<128x256xf32> to vector<128x256xbf16>
    %c0_8 = arith.constant 0 : index
    %c0_9 = arith.constant 0 : index
    %31 = vector.load %arg14[%c0_8, %c0_9] : memref<128x128xbf16, #tpu.memory_space<vmem>>, vector<128x128xbf16>
    %cst_10 = arith.constant dense<0.000000e+00> : vector<256x128xf32>
    %32 = tpu.matmul %30, %31, %cst_10 {dimension_numbers = #tpu.dot_dimension_numbers<[0], [0], [1], [1], [0, 1, 1, 1], [], []>} : vector<128x256xbf16>, vector<128x128xbf16>, vector<256x128xf32> -> vector<256x128xf32>
    %c0_11 = arith.constant 0 : index
    %c0_12 = arith.constant 0 : index
    %33 = vector.load %arg11[%c0_11, %c0_12] : memref<1x128xf32, #tpu.memory_space<vmem>>, vector<1x128xf32>
    %cst_13 = arith.constant dense<0xFF800000> : vector<128xf32>
    %34 = vector.multi_reduction <maximumf>, %32, %cst_13 [0] : vector<256x128xf32> to vector<128xf32>
    %35 = vector.shape_cast %34 : vector<128xf32> to vector<1x128xf32>
    %36 = arith.maximumf %33, %35 : vector<1x128xf32>
    %37 = arith.subf %33, %36 : vector<1x128xf32>
    %38 = math.exp %37 : vector<1x128xf32>
    %39 = vector.broadcast %36 : vector<1x128xf32> to vector<256x128xf32>
    %40 = arith.subf %32, %39 : vector<256x128xf32>
    %41 = math.exp %40 : vector<256x128xf32>
    %c0_14 = arith.constant 0 : index
    %c0_15 = arith.constant 0 : index
    %42 = vector.load %arg12[%c0_14, %c0_15] : memref<1x128xf32, #tpu.memory_space<vmem>>, vector<1x128xf32>
    %43 = arith.mulf %38, %42 : vector<1x128xf32>
    %cst_16 = arith.constant dense<0.000000e+00> : vector<128xf32>
    %44 = vector.multi_reduction <add>, %41, %cst_16 [0] : vector<256x128xf32> to vector<128xf32>
    %45 = vector.shape_cast %44 : vector<128xf32> to vector<1x128xf32>
    %46 = arith.addf %43, %45 : vector<1x128xf32>
    %c0_17 = arith.constant 0 : index
    %c0_18 = arith.constant 0 : index
    %47 = vector.load %arg12[%c0_17, %c0_18] : memref<1x128xf32, #tpu.memory_space<vmem>>, vector<1x128xf32>
    tpu.vector_store %arg12[%c0_17, %c0_18], %46 {strides = array<i32>} : memref<1x128xf32, #tpu.memory_space<vmem>>, vector<1x128xf32>,
    %c0_19 = arith.constant 0 : index
    %c0_20 = arith.constant 0 : index
    %48 = vector.load %arg9[%c0_19, %c0_20] : memref<8x256xf32, #tpu.memory_space<vmem>>, vector<8x256xf32>
    %49 = arith.truncf %48 : vector<8x256xf32> to vector<8x256xbf16>
    %50 = arith.truncf %41 : vector<256x128xf32> to vector<256x128xbf16>
    %cst_21 = arith.constant dense<0.000000e+00> : vector<8x128xf32>
    %51 = tpu.matmul %49, %50, %cst_21 {dimension_numbers = #tpu.dot_dimension_numbers<[1], [0], [0], [1], [0, 0, 1, 1], [], []>} : vector<8x256xbf16>, vector<256x128xbf16>, vector<8x128xf32> -> vector<8x128xf32>
    %c0_22 = arith.constant 0 : index
    %c0_23 = arith.constant 0 : index
    %52 = vector.load %arg13[%c0_22, %c0_23] : memref<8x128xf32, #tpu.memory_space<vmem>>, vector<8x128xf32>
    %53 = vector.broadcast %38 : vector<1x128xf32> to vector<8x128xf32>
    %54 = arith.mulf %53, %52 : vector<8x128xf32>
    %55 = arith.addf %54, %51 : vector<8x128xf32>
    %c0_24 = arith.constant 0 : index
    %c0_25 = arith.constant 0 : index
    %56 = vector.load %arg13[%c0_24, %c0_25] : memref<8x128xf32, #tpu.memory_space<vmem>>, vector<8x128xf32>
    tpu.vector_store %arg13[%c0_24, %c0_25], %55 {strides = array<i32>} : memref<8x128xf32, #tpu.memory_space<vmem>>, vector<8x128xf32>,
    %c0_26 = arith.constant 0 : index
    %c0_27 = arith.constant 0 : index
    %57 = vector.load %arg11[%c0_26, %c0_27] : memref<1x128xf32, #tpu.memory_space<vmem>>, vector<1x128xf32>
    tpu.vector_store %arg11[%c0_26, %c0_27], %36 {strides = array<i32>} : memref<1x128xf32, #tpu.memory_space<vmem>>, vector<1x128xf32>,
    %c0_i32_28 = arith.constant 0 : i32
    %58 = arith.cmpi eq, %arg2, %c0_i32_28 : i32
    %59 = arith.extui %58 : i1 to i32
    %c0_i32_29 = arith.constant 0 : i32
    %60 = arith.cmpi ne, %59, %c0_i32_29 : i32
    scf.if %60 {
      %c0_30 = arith.constant 0 : index
      %c0_31 = arith.constant 0 : index
      %61 = vector.load %arg12[%c0_30, %c0_31] : memref<1x128xf32, #tpu.memory_space<vmem>>, vector<1x128xf32>
      %62 = tpu.reciprocal %61 {approx = true} : vector<1x128xf32> -> vector<1x128xf32>
      %c0_32 = arith.constant 0 : index
      %c0_33 = arith.constant 0 : index
      %63 = vector.load %arg13[%c0_32, %c0_33] : memref<8x128xf32, #tpu.memory_space<vmem>>, vector<8x128xf32>
      %64 = vector.broadcast %62 : vector<1x128xf32> to vector<8x128xf32>
      %65 = arith.mulf %63, %64 : vector<8x128xf32>
      %66 = tpu.iota {dimensions = array<i32: 0>} : vector<8x128xi32>
      %c2_i32 = arith.constant 2 : i32
      %67 = vector.broadcast %c2_i32 : i32 to vector<8x128xi32>
      %68 = arith.cmpi eq, %66, %67 : vector<8x128xi32>
      %c0_34 = arith.constant 0 : index
      %c0_35 = arith.constant 0 : index
      %69 = vector.load %arg11[%c0_34, %c0_35] : memref<1x128xf32, #tpu.memory_space<vmem>>, vector<1x128xf32>
      %70 = vector.shape_cast %69 : vector<1x128xf32> to vector<1x128xf32>
      %71 = vector.broadcast %70 : vector<1x128xf32> to vector<8x128xf32>
      %72 = arith.select %68, %71, %65 : vector<8x128xi1>, vector<8x128xf32>
      %c0_36 = arith.constant 0 : index
      %c0_37 = arith.constant 0 : index
      %c0_38 = arith.constant 0 : index
      %73 = vector.load %arg10[%c0_36, %c0_37, %c0_38] : memref<1x8x128xf32, #tpu.memory_space<vmem>>, vector<1x8x128xf32>
      %74 = vector.shape_cast %73 : vector<1x8x128xf32> to vector<8x128xf32>
      %75 = vector.shape_cast %72 : vector<8x128xf32> to vector<1x8x128xf32>
      tpu.vector_store %arg10[%c0_36, %c0_37, %c0_38], %75 {strides = array<i32>} : memref<1x8x128xf32, #tpu.memory_space<vmem>>, vector<1x8x128xf32>,
    } else {
    }
    return
  }
  func.func @transform_0(%arg0: i32, %arg1: i32, %arg2: i32) -> (i32, i32, i32) {
    %c0_i32 = arith.constant 0 : i32
    %c0_i32_0 = arith.constant 0 : i32
    return %arg0, %c0_i32, %arg1 : i32, i32, i32
  }
  func.func @transform_1(%arg0: i32, %arg1: i32, %arg2: i32) -> (i32, i32, i32) {
    %c0_i32 = arith.constant 0 : i32
    %c0_i32_0 = arith.constant 0 : i32
    return %arg0, %c0_i32, %arg2 : i32, i32, i32
  }
  func.func @transform_2(%arg0: i32, %arg1: i32, %arg2: i32) -> (i32, i32) {
    %c0_i32 = arith.constant 0 : i32
    %c0_i32_0 = arith.constant 0 : i32
    %c0_i32_1 = arith.constant 0 : i32
    return %c0_i32, %c0_i32_0 : i32, i32
  }
  func.func @transform_3(%arg0: i32, %arg1: i32, %arg2: i32) -> (i32, i32) {
    %c0_i32 = arith.constant 0 : i32
    %c0_i32_0 = arith.constant 0 : i32
    %c0_i32_1 = arith.constant 0 : i32
    return %c0_i32, %c0_i32_0 : i32, i32
  }
  func.func @transform_4(%arg0: i32, %arg1: i32, %arg2: i32) -> (i32, i32) {
    %c0_i32 = arith.constant 0 : i32
    %c0_i32_0 = arith.constant 0 : i32
    %c0_i32_1 = arith.constant 0 : i32
    return %c0_i32, %c0_i32_0 : i32, i32
  }
  func.func @transform_5(%arg0: i32, %arg1: i32, %arg2: i32) -> (i32, i32) {
    %c0_i32 = arith.constant 0 : i32
    %c0_i32_0 = arith.constant 0 : i32
    %c0_i32_1 = arith.constant 0 : i32
    return %c0_i32, %c0_i32_0 : i32, i32
  }
  func.func @transform_6(%arg0: i32, %arg1: i32, %arg2: i32) -> (i32, i32) {
    %c0_i32 = arith.constant 0 : i32
    %c0_i32_0 = arith.constant 0 : i32
    return %c0_i32, %arg2 : i32, i32
  }
  func.func @transform_7(%arg0: i32, %arg1: i32, %arg2: i32) -> (i32, i32, i32) {
    %c0_i32 = arith.constant 0 : i32
    %c0_i32_0 = arith.constant 0 : i32
    return %arg0, %c0_i32, %arg1 : i32, i32, i32
  }
}

</mosaic_0001>

<llo_original>
// kernel: tpu_custom_call.1
$region0: #{tpu_custom_call.1}
  #allocation0 [shape = 'u32[]', space=smem, size = 0x4, offset = 0x4, fixed_abs, tag = 'smem constant byte address 0x4 - core index']
  #allocation1 [shape = 'u32[144,128]{1,0:T(1,128)}', space=vmem, size = 0x12000, scoped, tag = 'internal scratch']
  #allocation2 [shape = 'f32[1,128]{1,0:T(1,128)}', space=vmem, size = 0x200, scoped, tag = 'scratch operand']
  #allocation3 [shape = 'f32[1,128]{1,0:T(1,128)}', space=vmem, size = 0x200, scoped, tag = 'scratch operand']
  #allocation4 [shape = 'f32[8,128]{1,0:T(8,128)}', space=vmem, size = 0x1000, scoped, tag = 'scratch operand']
  #allocation5 [shape = 'bf16[128,128]{1,0:T(16,128)(2,1)}', space=vmem, size = 0x8000, scoped, tag = 'scratch operand']
  %s0 = inlined_call_operand.vmem [shape: f32[2,3,256], index: 0, kind: input, shape index: {}]
  %s1 = inlined_call_operand.vmem [shape: f32[2,3,256], index: 1, kind: input, shape index: {}]
  %s2 = inlined_call_operand.vmem [shape: f32[128,3], index: 2, kind: input, shape index: {}]
  %s3 = inlined_call_operand.vmem [shape: f32[128,1], index: 3, kind: input, shape index: {}]
  %s4 = inlined_call_operand.vmem [shape: f32[128,3], index: 4, kind: input, shape index: {}]
  %s5 = inlined_call_operand.vmem [shape: f32[128,1], index: 5, kind: input, shape index: {}]
  %s6 = inlined_call_operand.vmem [shape: f32[8,256], index: 6, kind: input, shape index: {}]
  %s7 = inlined_call_operand.hbm [shape: f32[2,8,256], index: 7, kind: output, shape index: {}]
  %s8 = sld [smem:[#allocation0]]
  $region69: #{tpu_custom_call.1} parent=0
    _
  %s10 = ssub.s32 1, %s8
  %s11 = scalar_select 0, %s10, %s8
  $region1: #{tpu_custom_call.1} parent=0
    #allocation6 [shape = 'u8[8192]{0}', space=vmem, size = 0x2000, scoped, tag = 'output window, operand 0']
    #allocation7 [shape = 's32[2]{0}', space=sflag, size = 0x8, scoped, tag = 'scoped memory for tpu_custom_call.1']
    %12 = vsyncpa [#allocation7], 0
    %s13 = scalar_lea.sflag [#allocation7], 1
    %14 = vsyncpa %s13, 0
    loop: start=0, step=1, limit=6
    $region2: #{tpu_custom_call.1} parent=1 // loop_pre_header
      _
    $region3: #{tpu_custom_call.1} parent=1 // loop_header
      %s16 = sphi 0, %s20
      %p17 = scmp.ge.s32.totalorder %s16, 6
      %s23 = sphi 0, %s42
      %s24 = sphi 0, %s38
      %s25 = sphi 0, %s34
      %s26 = sphi 0, %s23
      %s27 = sphi 0, %s24
      %s28 = sphi 0, %s25
      %s29 = sphi 0, %s26
      %s30 = sphi 0, %s27
      %s31 = sphi 0, %s28
      %s47 = sphi 0, %s49
      %s50 = sphi 0, %s47
      %s51 = sphi 0, %s50
      %s67 = sphi 0, %s51
      %s75 = sphi 0, %s77
      %s78 = sphi 0, %s75
      %s79 = sphi 0, %s78
      %s95 = sphi 0, %s79
      %s99 = sphi 0, %s99
      %s101 = sphi 0, %s99
      %s102 = sphi 0, %s101
      %s116 = sphi 0, %s102
      %s120 = sphi 0, %s120
      %s122 = sphi 0, %s120
      %s123 = sphi 0, %s122
      %s137 = sphi 0, %s123
      %s141 = sphi 0, %s141
      %s143 = sphi 0, %s141
      %s144 = sphi 0, %s143
      %s158 = sphi 0, %s144
      %s162 = sphi 0, %s162
      %s164 = sphi 0, %s162
      %s165 = sphi 0, %s164
      %s179 = sphi 0, %s165
      %s185 = sphi 0, %s187
      %s188 = sphi 0, %s185
      %s189 = sphi 0, %s188
      %s205 = sphi 0, %s189
      %s213 = sphi 0, %s215
      %s216 = sphi 0, %s213
      %s217 = sphi 0, %s216
      %s233 = sphi 0, %s217
    $region4: #{tpu_custom_call.1} parent=1 // loop_header_branch
      %19 = sbr.rel (%p17) target = $region8
    $region5: #{tpu_custom_call.1} parent=1 // loop_body
      %s21 = ssub.s32 %s16, 1
      %s22 = ssub.s32 %s16, 2
      %s32 = sadd.s32 1, %s25
      %p33 = scmp.ge.s32.totalorder %s32, 1
      %s34 = scalar_select %p33, 0, %s32
      %s35 = sadd.s32 1, %s24
      %s36 = scalar_select %p33, %s35, %s24
      %p37 = scmp.ge.s32.totalorder %s36, 2
      %s38 = scalar_select %p37, 0, %s36
      %s39 = sadd.s32 1, %s23
      %s40 = scalar_select %p37, %s39, %s23
      %p41 = scmp.ge.s32.totalorder %s40, 2
      %s42 = scalar_select %p41, 0, %s40
      %s43 = ssub.s32 %s23, %s42
      %s44 = ssub.s32 %s24, %s38
      %s45 = sor.u32 %s43, %s44
      %p46 = scmp.eq.s32.totalorder %s45, 0
      %s48 = sadd.s32 %s47, 1
      %s49 = scalar_select %p46, %s47, %s48
      %p52 = pneg %p46
      %p53 = scmp.eq.s32.totalorder %s16, 3
      %p54 = por %p52, %p53
      %p55 = scmp.ne.s32.totalorder %s47, %s50
      %p56 = scmp.eq.s32.totalorder %s16, 0
      %p57 = por %p55, %p56
      %p58 = scmp.ne.s32.totalorder %s47, %s50
      %p59 = scmp.eq.s32.totalorder %s21, 3
      %p60 = por %p58, %p59
      %p61 = scmp.ne.s32.totalorder %s50, %s51
      %p62 = scmp.eq.s32.totalorder %s21, 0
      %p63 = por %p61, %p62
      %p64 = scmp.ne.s32.totalorder %s50, %s51
      %p65 = scmp.eq.s32.totalorder %s22, 3
      %p66 = por %p64, %p65
      %p68 = scmp.ne.s32.totalorder %s51, %s67
      %p69 = scmp.eq.s32.totalorder %s22, 0
      %p70 = por %p68, %p69
      %s71 = ssub.s32 %s23, %s42
      %s72 = ssub.s32 %s25, %s34
      %s73 = sor.u32 %s71, %s72
      %p74 = scmp.eq.s32.totalorder %s73, 0
      %s76 = sadd.s32 %s75, 1
      %s77 = scalar_select %p74, %s75, %s76
      %p80 = pneg %p74
      %p81 = scmp.eq.s32.totalorder %s16, 3
      %p82 = por %p80, %p81
      %p83 = scmp.ne.s32.totalorder %s75, %s78
      %p84 = scmp.eq.s32.totalorder %s16, 0
      %p85 = por %p83, %p84
      %p86 = scmp.ne.s32.totalorder %s75, %s78
      %p87 = scmp.eq.s32.totalorder %s21, 3
      %p88 = por %p86, %p87
      %p89 = scmp.ne.s32.totalorder %s78, %s79
      %p90 = scmp.eq.s32.totalorder %s21, 0
      %p91 = por %p89, %p90
      %p92 = scmp.ne.s32.totalorder %s78, %s79
      %p93 = scmp.eq.s32.totalorder %s22, 3
      %p94 = por %p92, %p93
      %p96 = scmp.ne.s32.totalorder %s79, %s95
      %p97 = scmp.eq.s32.totalorder %s22, 0
      %p98 = por %p96, %p97
      %s100 = sadd.s32 %s99, 1
      %p103 = scmp.eq.s32.totalorder %s16, 3
      %p104 = scmp.ne.s32.totalorder %s99, %s101
      %p105 = scmp.eq.s32.totalorder %s16, 0
      %p106 = por %p104, %p105
      %p107 = scmp.ne.s32.totalorder %s99, %s101
      %p108 = scmp.eq.s32.totalorder %s21, 3
      %p109 = por %p107, %p108
      %p110 = scmp.ne.s32.totalorder %s101, %s102
      %p111 = scmp.eq.s32.totalorder %s21, 0
      %p112 = por %p110, %p111
      %p113 = scmp.ne.s32.totalorder %s101, %s102
      %p114 = scmp.eq.s32.totalorder %s22, 3
      %p115 = por %p113, %p114
      %p117 = scmp.ne.s32.totalorder %s102, %s116
      %p118 = scmp.eq.s32.totalorder %s22, 0
      %p119 = por %p117, %p118
      %s121 = sadd.s32 %s120, 1
      %p124 = scmp.eq.s32.totalorder %s16, 3
      %p125 = scmp.ne.s32.totalorder %s120, %s122
      %p126 = scmp.eq.s32.totalorder %s16, 0
      %p127 = por %p125, %p126
      %p128 = scmp.ne.s32.totalorder %s120, %s122
      %p129 = scmp.eq.s32.totalorder %s21, 3
      %p130 = por %p128, %p129
      %p131 = scmp.ne.s32.totalorder %s122, %s123
      %p132 = scmp.eq.s32.totalorder %s21, 0
      %p133 = por %p131, %p132
      %p134 = scmp.ne.s32.totalorder %s122, %s123
      %p135 = scmp.eq.s32.totalorder %s22, 3
      %p136 = por %p134, %p135
      %p138 = scmp.ne.s32.totalorder %s123, %s137
      %p139 = scmp.eq.s32.totalorder %s22, 0
      %p140 = por %p138, %p139
      %s142 = sadd.s32 %s141, 1
      %p145 = scmp.eq.s32.totalorder %s16, 3
      %p146 = scmp.ne.s32.totalorder %s141, %s143
      %p147 = scmp.eq.s32.totalorder %s16, 0
      %p148 = por %p146, %p147
      %p149 = scmp.ne.s32.totalorder %s141, %s143
      %p150 = scmp.eq.s32.totalorder %s21, 3
      %p151 = por %p149, %p150
      %p152 = scmp.ne.s32.totalorder %s143, %s144
      %p153 = scmp.eq.s32.totalorder %s21, 0
      %p154 = por %p152, %p153
      %p155 = scmp.ne.s32.totalorder %s143, %s144
      %p156 = scmp.eq.s32.totalorder %s22, 3
      %p157 = por %p155, %p156
      %p159 = scmp.ne.s32.totalorder %s144, %s158
      %p160 = scmp.eq.s32.totalorder %s22, 0
      %p161 = por %p159, %p160
      %s163 = sadd.s32 %s162, 1
      %p166 = scmp.eq.s32.totalorder %s16, 3
      %p167 = scmp.ne.s32.totalorder %s162, %s164
      %p168 = scmp.eq.s32.totalorder %s16, 0
      %p169 = por %p167, %p168
      %p170 = scmp.ne.s32.totalorder %s162, %s164
      %p171 = scmp.eq.s32.totalorder %s21, 3
      %p172 = por %p170, %p171
      %p173 = scmp.ne.s32.totalorder %s164, %s165
      %p174 = scmp.eq.s32.totalorder %s21, 0
      %p175 = por %p173, %p174
      %p176 = scmp.ne.s32.totalorder %s164, %s165
      %p177 = scmp.eq.s32.totalorder %s22, 3
      %p178 = por %p176, %p177
      %p180 = scmp.ne.s32.totalorder %s165, %s179
      %p181 = scmp.eq.s32.totalorder %s22, 0
      %p182 = por %p180, %p181
      %s183 = ssub.s32 %s25, %s34
      %p184 = scmp.eq.s32.totalorder %s183, 0
      %s186 = sadd.s32 %s185, 1
      %s187 = scalar_select %p184, %s185, %s186
      %p190 = pneg %p184
      %p191 = scmp.eq.s32.totalorder %s16, 3
      %p192 = por %p190, %p191
      %p193 = scmp.ne.s32.totalorder %s185, %s188
      %p194 = scmp.eq.s32.totalorder %s16, 0
      %p195 = por %p193, %p194
      %p196 = scmp.ne.s32.totalorder %s185, %s188
      %p197 = scmp.eq.s32.totalorder %s21, 3
      %p198 = por %p196, %p197
      %p199 = scmp.ne.s32.totalorder %s188, %s189
      %p200 = scmp.eq.s32.totalorder %s21, 0
      %p201 = por %p199, %p200
      %p202 = scmp.ne.s32.totalorder %s188, %s189
      %p203 = scmp.eq.s32.totalorder %s22, 3
      %p204 = por %p202, %p203
      %p206 = scmp.ne.s32.totalorder %s189, %s205
      %p207 = scmp.eq.s32.totalorder %s22, 0
      %p208 = por %p206, %p207
      %s209 = ssub.s32 %s23, %s42
      %s210 = ssub.s32 %s24, %s38
      %s211 = sor.u32 %s209, %s210
      %p212 = scmp.eq.s32.totalorder %s211, 0
      %s214 = sadd.s32 %s213, 1
      %s215 = scalar_select %p212, %s213, %s214
      %p218 = pneg %p212
      %p219 = scmp.eq.s32.totalorder %s16, 3
      %p220 = por %p218, %p219
      %p221 = scmp.ne.s32.totalorder %s213, %s216
      %p222 = scmp.eq.s32.totalorder %s16, 0
      %p223 = por %p221, %p222
      %p224 = scmp.ne.s32.totalorder %s213, %s216
      %p225 = scmp.eq.s32.totalorder %s21, 3
      %p226 = por %p224, %p225
      %p227 = scmp.ne.s32.totalorder %s216, %s217
      %p228 = scmp.eq.s32.totalorder %s21, 0
      %p229 = por %p227, %p228
      %p230 = scmp.ne.s32.totalorder %s216, %s217
      %p231 = scmp.eq.s32.totalorder %s22, 3
      %p232 = por %p230, %p231
      %p234 = scmp.ne.s32.totalorder %s217, %s233
      %p235 = scmp.eq.s32.totalorder %s22, 0
      %p236 = por %p234, %p235
      %p237 = scmp.le.s32.totalorder 1, %s16
      %p238 = scmp.lt.s32.totalorder %s16, 5
      %p239 = pnand %p237, %p238
      %p240 = pneg %p239
      // Predicated region
      $region9: #{tpu_custom_call.1} parent=5 // pred_check
        _
      $region10: #{tpu_custom_call.1} parent=5 // pred_check_branch
        %242 = sbr.rel (%p239) target = $region12
      $region11: #{tpu_custom_call.1} parent=5 // pred_region
        %s243 = ssub.s32 %s16, 1
        // Predicated region
        $region13: #{tpu_custom_call.1} parent=11 // pred_check
          %p244 = pneg %p112
        $region14: #{tpu_custom_call.1} parent=11 // pred_check_branch
          %246 = sbr.rel (%p244) target = $region16
        $region15: #{tpu_custom_call.1} parent=11 // pred_region
          _
        $region16: #{tpu_custom_call.1} parent=11 // pred_fallthru
          _
        // Predicated region
        $region17: #{tpu_custom_call.1} parent=11 // pred_check
          %p247 = pneg %p133
        $region18: #{tpu_custom_call.1} parent=11 // pred_check_branch
          %249 = sbr.rel (%p247) target = $region20
        $region19: #{tpu_custom_call.1} parent=11 // pred_region
          _
        $region20: #{tpu_custom_call.1} parent=11 // pred_fallthru
          _
        // Predicated region
        $region21: #{tpu_custom_call.1} parent=11 // pred_check
          %p250 = pneg %p154
        $region22: #{tpu_custom_call.1} parent=11 // pred_check_branch
          %252 = sbr.rel (%p250) target = $region24
        $region23: #{tpu_custom_call.1} parent=11 // pred_region
          _
        $region24: #{tpu_custom_call.1} parent=11 // pred_fallthru
          _
        // Predicated region
        $region25: #{tpu_custom_call.1} parent=11 // pred_check
          %p253 = pneg %p175
        $region26: #{tpu_custom_call.1} parent=11 // pred_check_branch
          %255 = sbr.rel (%p253) target = $region28
        $region27: #{tpu_custom_call.1} parent=11 // pred_region
          _
        $region28: #{tpu_custom_call.1} parent=11 // pred_fallthru
          _
        // Predicated region
        $region29: #{tpu_custom_call.1} parent=11 // pred_check
          %p256 = pneg %p201
        $region30: #{tpu_custom_call.1} parent=11 // pred_check_branch
          %258 = sbr.rel (%p256) target = $region32
        $region31: #{tpu_custom_call.1} parent=11 // pred_region
          %s259 = smul.u32 2, %s28
          %p260 = scmp.lt.s32.totalorder %s259, 1
          %s261 = scalar_select %p260, %s259, 1
          %s262 = smul.addr %s261, 8
          %s263 = scalar_lea.vmem %s6, %s262
          %s264 = smul.u32 2, %s28
        $region32: #{tpu_custom_call.1} parent=11 // pred_fallthru
          _
      $region12: #{tpu_custom_call.1} parent=5 // pred_fallthru
        _
      %p265 = scmp.lt.s32.totalorder %s16, 4
      // Predicated region
      $region33: #{tpu_custom_call.1} parent=5 // pred_check
        %p266 = pneg %p265
      $region34: #{tpu_custom_call.1} parent=5 // pred_check_branch
        %268 = sbr.rel (%p266) target = $region36
      $region35: #{tpu_custom_call.1} parent=5 // pred_region
        // Predicated region
        $region37: #{tpu_custom_call.1} parent=35 // pred_check
          %p269 = pneg %p57
        $region38: #{tpu_custom_call.1} parent=35 // pred_check_branch
          %271 = sbr.rel (%p269) target = $region40
        $region39: #{tpu_custom_call.1} parent=35 // pred_region
          %p272 = scmp.lt.s32.totalorder %s23, 1
          %s273 = scalar_select %p272, %s23, 1
          %p274 = scmp.lt.s32.totalorder %s24, 1
          %s275 = scalar_select %p274, %s24, 1
          %s276 = smul.addr %s273, 2
          %s277 = sadd.s32 %s275, %s276
          %s278 = smul.addr %s277, 4
          %s279 = scalar_lea.vmem %s0, %s278
        $region40: #{tpu_custom_call.1} parent=35 // pred_fallthru
          _
        // Predicated region
        $region41: #{tpu_custom_call.1} parent=35 // pred_check
          %p280 = pneg %p85
        $region42: #{tpu_custom_call.1} parent=35 // pred_check_branch
          %282 = sbr.rel (%p280) target = $region44
        $region43: #{tpu_custom_call.1} parent=35 // pred_region
          %s283 = smul.u32 2, %s25
          %p284 = scmp.lt.s32.totalorder %s23, 1
          %s285 = scalar_select %p284, %s23, 1
          %p286 = scmp.lt.s32.totalorder %s283, 1
          %s287 = scalar_select %p286, %s283, 1
          %s288 = smul.addr %s285, 2
          %s289 = sadd.s32 %s287, %s288
          %s290 = smul.addr %s289, 4
          %s291 = scalar_lea.vmem %s1, %s290
          %s292 = smul.u32 2, %s25
        $region44: #{tpu_custom_call.1} parent=35 // pred_fallthru
          _
      $region36: #{tpu_custom_call.1} parent=5 // pred_fallthru
        _
      %p293 = scmp.le.s32.totalorder 1, %s16
      %p294 = scmp.lt.s32.totalorder %s16, 5
      %p295 = pnand %p293, %p294
      %p296 = pneg %p295
      // Predicated region
      $region45: #{tpu_custom_call.1} parent=5 // pred_check
        _
      $region46: #{tpu_custom_call.1} parent=5 // pred_check_branch
        %298 = sbr.rel (%p295) target = $region48
      $region47: #{tpu_custom_call.1} parent=5 // pred_region
        %s299 = ssub.s32 %s16, 1
        %p300 = scmp.lt.s32.totalorder %s26, 1
        %s301 = scalar_select %p300, %s26, 1
        %p302 = scmp.lt.s32.totalorder %s27, 1
        %s303 = scalar_select %p302, %s27, 1
        %s304 = smul.addr %s301, 2
        %s305 = sadd.s32 %s303, %s304
        %s306 = smul.addr %s305, 4
        %s307 = scalar_lea.vmem %s0, %s306
        %p308 = pneg %p63
        %p309 = pneg %p60
        %s310 = smul.u32 2, %s28
        %p311 = scmp.lt.s32.totalorder %s26, 1
        %s312 = scalar_select %p311, %s26, 1
        %p313 = scmp.lt.s32.totalorder %s310, 1
        %s314 = scalar_select %p313, %s310, 1
        %s315 = smul.addr %s312, 2
        %s316 = sadd.s32 %s314, %s315
        %s317 = smul.addr %s316, 4
        %s318 = scalar_lea.vmem %s1, %s317
        %p319 = pneg %p91
        %p320 = pneg %p88
        %p321 = pneg %p112
        %p322 = pneg %p109
        %p323 = pneg %p133
        %p324 = pneg %p130
        %p325 = pneg %p154
        %p326 = pneg %p151
        %p327 = pneg %p175
        %p328 = pneg %p172
        %s329 = smul.u32 2, %s28
        %p330 = scmp.lt.s32.totalorder %s329, 1
        %s331 = scalar_select %p330, %s329, 1
        %s332 = smul.addr %s331, 8
        %s333 = scalar_lea.vmem %s6, %s332
        %p334 = pneg %p201
        %p335 = pneg %p198
        %p336 = pneg %p229
        %p337 = pneg %p226
        %s338 = sand.u32 %s216, 1
        %s339 = scalar_lea.sflag [#allocation7], %s338
        %s340 = sand.u32 %s216, 1
        %s341 = smul.addr %s340, 8
        %s342 = scalar_lea.vmem [#allocation6], %s341
        %p343 = scmp.lt.s32.totalorder %s26, 1
        %s344 = scalar_select %p343, %s26, 1
        %p345 = scmp.lt.s32.totalorder %s27, 1
        %s346 = scalar_select %p345, %s27, 1
        %s347 = smul.addr %s344, 2
        %s348 = sadd.s32 %s346, %s347
        %s349 = smul.addr %s348, 4
        %s350 = scalar_lea.vmem %s0, %s349
        %s351 = smul.u32 2, %s28
        %p352 = scmp.lt.s32.totalorder %s26, 1
        %s353 = scalar_select %p352, %s26, 1
        %p354 = scmp.lt.s32.totalorder %s351, 1
        %s355 = scalar_select %p354, %s351, 1
        %s356 = smul.addr %s353, 2
        %s357 = sadd.s32 %s355, %s356
        %s358 = smul.addr %s357, 4
        %s359 = scalar_lea.vmem %s1, %s358
        %s360 = smul.u32 2, %s28
        %s361 = smul.u32 2, %s28
        %p362 = scmp.lt.s32.totalorder %s361, 1
        %s363 = scalar_select %p362, %s361, 1
        %s364 = smul.addr %s363, 8
        %s365 = scalar_lea.vmem %s6, %s364
        %s366 = smul.u32 2, %s28
        %p368 = scmp.eq.s32.totalorder %s28, 0
        // Predicated region
        $region49: #{tpu_custom_call.1} parent=47 // pred_check
          %p369 = pneg %p368
        $region50: #{tpu_custom_call.1} parent=47 // pred_check_branch
          %371 = sbr.rel (%p369) target = $region52
        $region51: #{tpu_custom_call.1} parent=47 // pred_region
          %372 = vst [vmem:[#allocation2] sm:$0x1] -inf
          %373 = vst [vmem:[#allocation3] sm:$0x1] 0.0
          %374 = vst [vmem:[#allocation4] sm:$0xff] 0.0
          %v375 = vld [vmem:[%s350] sm:$0x7]
          %v376 = vld [vmem:[%s2] sm:$0xff]
          %v377 = vld [vmem:[%s2 + $0x8] sm:$0xff]
          %v378 = vld [vmem:[%s2 + $0x10] sm:$0xff]
          %v379 = vld [vmem:[%s2 + $0x18] sm:$0xff]
          %v380 = vld [vmem:[%s2 + $0x20] sm:$0xff]
          %v381 = vld [vmem:[%s2 + $0x28] sm:$0xff]
          %v382 = vld [vmem:[%s2 + $0x30] sm:$0xff]
          %v383 = vld [vmem:[%s2 + $0x38] sm:$0xff]
          %v384 = vld [vmem:[%s2 + $0x40] sm:$0xff]
          %v385 = vld [vmem:[%s2 + $0x48] sm:$0xff]
          %v386 = vld [vmem:[%s2 + $0x50] sm:$0xff]
          %v387 = vld [vmem:[%s2 + $0x58] sm:$0xff]
          %v388 = vld [vmem:[%s2 + $0x60] sm:$0xff]
          %v389 = vld [vmem:[%s2 + $0x68] sm:$0xff]
          %v390 = vld [vmem:[%s2 + $0x70] sm:$0xff]
          %v391 = vld [vmem:[%s2 + $0x78] sm:$0xff]
          %v392 = vld [vmem:[%s3] sm:$0xff]
          %v393 = vld [vmem:[%s3 + $0x8] sm:$0xff]
          %v394 = vld [vmem:[%s3 + $0x10] sm:$0xff]
          %v395 = vld [vmem:[%s3 + $0x18] sm:$0xff]
          %v396 = vld [vmem:[%s3 + $0x20] sm:$0xff]
          %v397 = vld [vmem:[%s3 + $0x28] sm:$0xff]
          %v398 = vld [vmem:[%s3 + $0x30] sm:$0xff]
          %v399 = vld [vmem:[%s3 + $0x38] sm:$0xff]
          %v400 = vld [vmem:[%s3 + $0x40] sm:$0xff]
          %v401 = vld [vmem:[%s3 + $0x48] sm:$0xff]
          %v402 = vld [vmem:[%s3 + $0x50] sm:$0xff]
          %v403 = vld [vmem:[%s3 + $0x58] sm:$0xff]
          %v404 = vld [vmem:[%s3 + $0x60] sm:$0xff]
          %v405 = vld [vmem:[%s3 + $0x68] sm:$0xff]
          %v406 = vld [vmem:[%s3 + $0x70] sm:$0xff]
          %v407 = vld [vmem:[%s3 + $0x78] sm:$0xff]
          %409 = vset.pattern.permute.xlu0 0
          %410 = vperm.xlu0 %409, %v376
          %v411 = vpop.permute.xlu0 %410
          %414 = vset.pattern.permute.xlu0 0
          %415 = vperm.xlu0 %414, %v377
          %v416 = vpop.permute.xlu0 %415
          %419 = vset.pattern.permute.xlu0 0
          %420 = vperm.xlu0 %419, %v378
          %v421 = vpop.permute.xlu0 %420
          %424 = vset.pattern.permute.xlu0 0
          %425 = vperm.xlu0 %424, %v379
          %v426 = vpop.permute.xlu0 %425
          %429 = vset.pattern.permute.xlu0 0
          %430 = vperm.xlu0 %429, %v380
          %v431 = vpop.permute.xlu0 %430
          %434 = vset.pattern.permute.xlu0 0
          %435 = vperm.xlu0 %434, %v381
          %v436 = vpop.permute.xlu0 %435
          %439 = vset.pattern.permute.xlu0 0
          %440 = vperm.xlu0 %439, %v382
          %v441 = vpop.permute.xlu0 %440
          %444 = vset.pattern.permute.xlu0 0
          %445 = vperm.xlu0 %444, %v383
          %v446 = vpop.permute.xlu0 %445
          %449 = vset.pattern.permute.xlu0 0
          %450 = vperm.xlu0 %449, %v384
          %v451 = vpop.permute.xlu0 %450
          %454 = vset.pattern.permute.xlu0 0
          %455 = vperm.xlu0 %454, %v385
          %v456 = vpop.permute.xlu0 %455
          %459 = vset.pattern.permute.xlu0 0
          %460 = vperm.xlu0 %459, %v386
          %v461 = vpop.permute.xlu0 %460
          %464 = vset.pattern.permute.xlu0 0
          %465 = vperm.xlu0 %464, %v387
          %v466 = vpop.permute.xlu0 %465
          %469 = vset.pattern.permute.xlu0 0
          %470 = vperm.xlu0 %469, %v388
          %v471 = vpop.permute.xlu0 %470
          %474 = vset.pattern.permute.xlu0 0
          %475 = vperm.xlu0 %474, %v389
          %v476 = vpop.permute.xlu0 %475
          %479 = vset.pattern.permute.xlu0 0
          %480 = vperm.xlu0 %479, %v390
          %v481 = vpop.permute.xlu0 %480
          %484 = vset.pattern.permute.xlu0 0
          %485 = vperm.xlu0 %484, %v391
          %v486 = vpop.permute.xlu0 %485
          %v488 = vlaneseq
          %v489 = vshrl.u32 %v488, 7
          %v490 = vsub.s32 0, %v489
          %v491 = vrot.slane %v375, %v490
          %v492 = vmul.f32 %v411, %v491
          %v493 = vmul.f32 %v416, %v491
          %v494 = vmul.f32 %v421, %v491
          %v495 = vmul.f32 %v426, %v491
          %v496 = vmul.f32 %v431, %v491
          %v497 = vmul.f32 %v436, %v491
          %v498 = vmul.f32 %v441, %v491
          %v499 = vmul.f32 %v446, %v491
          %v500 = vmul.f32 %v451, %v491
          %v501 = vmul.f32 %v456, %v491
          %v502 = vmul.f32 %v461, %v491
          %v503 = vmul.f32 %v466, %v491
          %v504 = vmul.f32 %v471, %v491
          %v505 = vmul.f32 %v476, %v491
          %v506 = vmul.f32 %v481, %v491
          %v507 = vmul.f32 %v486, %v491
          %v508 = vadd.f32 %v492, 0.0
          %v509 = vadd.f32 %v493, 0.0
          %v510 = vadd.f32 %v494, 0.0
          %v511 = vadd.f32 %v495, 0.0
          %v512 = vadd.f32 %v496, 0.0
          %v513 = vadd.f32 %v497, 0.0
          %v514 = vadd.f32 %v498, 0.0
          %v515 = vadd.f32 %v499, 0.0
          %v516 = vadd.f32 %v500, 0.0
          %v517 = vadd.f32 %v501, 0.0
          %v518 = vadd.f32 %v502, 0.0
          %v519 = vadd.f32 %v503, 0.0
          %v520 = vadd.f32 %v504, 0.0
          %v521 = vadd.f32 %v505, 0.0
          %v522 = vadd.f32 %v506, 0.0
          %v523 = vadd.f32 %v507, 0.0
          %524 = vset.pattern.permute.xlu0 1
          %525 = vperm.xlu0 %524, %v376
          %v526 = vpop.permute.xlu0 %525
          %528 = vset.pattern.permute.xlu0 1
          %529 = vperm.xlu0 %528, %v377
          %v530 = vpop.permute.xlu0 %529
          %532 = vset.pattern.permute.xlu0 1
          %533 = vperm.xlu0 %532, %v378
          %v534 = vpop.permute.xlu0 %533
          %536 = vset.pattern.permute.xlu0 1
          %537 = vperm.xlu0 %536, %v379
          %v538 = vpop.permute.xlu0 %537
          %540 = vset.pattern.permute.xlu0 1
          %541 = vperm.xlu0 %540, %v380
          %v542 = vpop.permute.xlu0 %541
          %544 = vset.pattern.permute.xlu0 1
          %545 = vperm.xlu0 %544, %v381
          %v546 = vpop.permute.xlu0 %545
          %548 = vset.pattern.permute.xlu0 1
          %549 = vperm.xlu0 %548, %v382
          %v550 = vpop.permute.xlu0 %549
          %552 = vset.pattern.permute.xlu0 1
          %553 = vperm.xlu0 %552, %v383
          %v554 = vpop.permute.xlu0 %553
          %556 = vset.pattern.permute.xlu0 1
          %557 = vperm.xlu0 %556, %v384
          %v558 = vpop.permute.xlu0 %557
          %560 = vset.pattern.permute.xlu0 1
          %561 = vperm.xlu0 %560, %v385
          %v562 = vpop.permute.xlu0 %561
          %564 = vset.pattern.permute.xlu0 1
          %565 = vperm.xlu0 %564, %v386
          %v566 = vpop.permute.xlu0 %565
          %568 = vset.pattern.permute.xlu0 1
          %569 = vperm.xlu0 %568, %v387
          %v570 = vpop.permute.xlu0 %569
          %572 = vset.pattern.permute.xlu0 1
          %573 = vperm.xlu0 %572, %v388
          %v574 = vpop.permute.xlu0 %573
          %576 = vset.pattern.permute.xlu0 1
          %577 = vperm.xlu0 %576, %v389
          %v578 = vpop.permute.xlu0 %577
          %580 = vset.pattern.permute.xlu0 1
          %581 = vperm.xlu0 %580, %v390
          %v582 = vpop.permute.xlu0 %581
          %584 = vset.pattern.permute.xlu0 1
          %585 = vperm.xlu0 %584, %v391
          %v586 = vpop.permute.xlu0 %585
          %v588 = vlaneseq
          %v589 = vshrl.u32 %v588, 7
          %v590 = vsub.s32 1, %v589
          %v591 = vrot.slane %v375, %v590
          %v592 = vmul.f32 %v526, %v591
          %v593 = vmul.f32 %v530, %v591
          %v594 = vmul.f32 %v534, %v591
          %v595 = vmul.f32 %v538, %v591
          %v596 = vmul.f32 %v542, %v591
          %v597 = vmul.f32 %v546, %v591
          %v598 = vmul.f32 %v550, %v591
          %v599 = vmul.f32 %v554, %v591
          %v600 = vmul.f32 %v558, %v591
          %v601 = vmul.f32 %v562, %v591
          %v602 = vmul.f32 %v566, %v591
          %v603 = vmul.f32 %v570, %v591
          %v604 = vmul.f32 %v574, %v591
          %v605 = vmul.f32 %v578, %v591
          %v606 = vmul.f32 %v582, %v591
          %v607 = vmul.f32 %v586, %v591
          %v608 = vadd.f32 %v508, %v592
          %v609 = vadd.f32 %v509, %v593
          %v610 = vadd.f32 %v510, %v594
          %v611 = vadd.f32 %v511, %v595
          %v612 = vadd.f32 %v512, %v596
          %v613 = vadd.f32 %v513, %v597
          %v614 = vadd.f32 %v514, %v598
          %v615 = vadd.f32 %v515, %v599
          %v616 = vadd.f32 %v516, %v600
          %v617 = vadd.f32 %v517, %v601
          %v618 = vadd.f32 %v518, %v602
          %v619 = vadd.f32 %v519, %v603
          %v620 = vadd.f32 %v520, %v604
          %v621 = vadd.f32 %v521, %v605
          %v622 = vadd.f32 %v522, %v606
          %v623 = vadd.f32 %v523, %v607
          %624 = vset.pattern.permute.xlu0 2
          %625 = vperm.xlu0 %624, %v376
          %v626 = vpop.permute.xlu0 %625
          %628 = vset.pattern.permute.xlu0 2
          %629 = vperm.xlu0 %628, %v377
          %v630 = vpop.permute.xlu0 %629
          %632 = vset.pattern.permute.xlu0 2
          %633 = vperm.xlu0 %632, %v378
          %v634 = vpop.permute.xlu0 %633
          %636 = vset.pattern.permute.xlu0 2
          %637 = vperm.xlu0 %636, %v379
          %v638 = vpop.permute.xlu0 %637
          %640 = vset.pattern.permute.xlu0 2
          %641 = vperm.xlu0 %640, %v380
          %v642 = vpop.permute.xlu0 %641
          %644 = vset.pattern.permute.xlu0 2
          %645 = vperm.xlu0 %644, %v381
          %v646 = vpop.permute.xlu0 %645
          %648 = vset.pattern.permute.xlu0 2
          %649 = vperm.xlu0 %648, %v382
          %v650 = vpop.permute.xlu0 %649
          %652 = vset.pattern.permute.xlu0 2
          %653 = vperm.xlu0 %652, %v383
          %v654 = vpop.permute.xlu0 %653
          %656 = vset.pattern.permute.xlu0 2
          %657 = vperm.xlu0 %656, %v384
          %v658 = vpop.permute.xlu0 %657
          %660 = vset.pattern.permute.xlu0 2
          %661 = vperm.xlu0 %660, %v385
          %v662 = vpop.permute.xlu0 %661
          %664 = vset.pattern.permute.xlu0 2
          %665 = vperm.xlu0 %664, %v386
          %v666 = vpop.permute.xlu0 %665
          %668 = vset.pattern.permute.xlu0 2
          %669 = vperm.xlu0 %668, %v387
          %v670 = vpop.permute.xlu0 %669
          %672 = vset.pattern.permute.xlu0 2
          %673 = vperm.xlu0 %672, %v388
          %v674 = vpop.permute.xlu0 %673
          %676 = vset.pattern.permute.xlu0 2
          %677 = vperm.xlu0 %676, %v389
          %v678 = vpop.permute.xlu0 %677
          %680 = vset.pattern.permute.xlu0 2
          %681 = vperm.xlu0 %680, %v390
          %v682 = vpop.permute.xlu0 %681
          %684 = vset.pattern.permute.xlu0 2
          %685 = vperm.xlu0 %684, %v391
          %v686 = vpop.permute.xlu0 %685
          %v688 = vlaneseq
          %v689 = vshrl.u32 %v688, 7
          %v690 = vsub.s32 2, %v689
          %v691 = vrot.slane %v375, %v690
          %v692 = vmul.f32 %v626, %v691
          %v693 = vmul.f32 %v630, %v691
          %v694 = vmul.f32 %v634, %v691
          %v695 = vmul.f32 %v638, %v691
          %v696 = vmul.f32 %v642, %v691
          %v697 = vmul.f32 %v646, %v691
          %v698 = vmul.f32 %v650, %v691
          %v699 = vmul.f32 %v654, %v691
          %v700 = vmul.f32 %v658, %v691
          %v701 = vmul.f32 %v662, %v691
          %v702 = vmul.f32 %v666, %v691
          %v703 = vmul.f32 %v670, %v691
          %v704 = vmul.f32 %v674, %v691
          %v705 = vmul.f32 %v678, %v691
          %v706 = vmul.f32 %v682, %v691
          %v707 = vmul.f32 %v686, %v691
          %v708 = vadd.f32 %v608, %v692
          %v709 = vadd.f32 %v609, %v693
          %v710 = vadd.f32 %v610, %v694
          %v711 = vadd.f32 %v611, %v695
          %v712 = vadd.f32 %v612, %v696
          %v713 = vadd.f32 %v613, %v697
          %v714 = vadd.f32 %v614, %v698
          %v715 = vadd.f32 %v615, %v699
          %v716 = vadd.f32 %v616, %v700
          %v717 = vadd.f32 %v617, %v701
          %v718 = vadd.f32 %v618, %v702
          %v719 = vadd.f32 %v619, %v703
          %v720 = vadd.f32 %v620, %v704
          %v721 = vadd.f32 %v621, %v705
          %v722 = vadd.f32 %v622, %v706
          %v723 = vadd.f32 %v623, %v707
          %725 = vset.pattern.permute.xlu0 0
          %726 = vperm.xlu0 %725, %v392
          %v727 = vpop.permute.xlu0 %726
          %730 = vset.pattern.permute.xlu0 0
          %731 = vperm.xlu0 %730, %v393
          %v732 = vpop.permute.xlu0 %731
          %735 = vset.pattern.permute.xlu0 0
          %736 = vperm.xlu0 %735, %v394
          %v737 = vpop.permute.xlu0 %736
          %740 = vset.pattern.permute.xlu0 0
          %741 = vperm.xlu0 %740, %v395
          %v742 = vpop.permute.xlu0 %741
          %745 = vset.pattern.permute.xlu0 0
          %746 = vperm.xlu0 %745, %v396
          %v747 = vpop.permute.xlu0 %746
          %750 = vset.pattern.permute.xlu0 0
          %751 = vperm.xlu0 %750, %v397
          %v752 = vpop.permute.xlu0 %751
          %755 = vset.pattern.permute.xlu0 0
          %756 = vperm.xlu0 %755, %v398
          %v757 = vpop.permute.xlu0 %756
          %760 = vset.pattern.permute.xlu0 0
          %761 = vperm.xlu0 %760, %v399
          %v762 = vpop.permute.xlu0 %761
          %765 = vset.pattern.permute.xlu0 0
          %766 = vperm.xlu0 %765, %v400
          %v767 = vpop.permute.xlu0 %766
          %770 = vset.pattern.permute.xlu0 0
          %771 = vperm.xlu0 %770, %v401
          %v772 = vpop.permute.xlu0 %771
          %775 = vset.pattern.permute.xlu0 0
          %776 = vperm.xlu0 %775, %v402
          %v777 = vpop.permute.xlu0 %776
          %780 = vset.pattern.permute.xlu0 0
          %781 = vperm.xlu0 %780, %v403
          %v782 = vpop.permute.xlu0 %781
          %785 = vset.pattern.permute.xlu0 0
          %786 = vperm.xlu0 %785, %v404
          %v787 = vpop.permute.xlu0 %786
          %790 = vset.pattern.permute.xlu0 0
          %791 = vperm.xlu0 %790, %v405
          %v792 = vpop.permute.xlu0 %791
          %795 = vset.pattern.permute.xlu0 0
          %796 = vperm.xlu0 %795, %v406
          %v797 = vpop.permute.xlu0 %796
          %800 = vset.pattern.permute.xlu0 0
          %801 = vperm.xlu0 %800, %v407
          %v802 = vpop.permute.xlu0 %801
          %v804 = vadd.f32 %v708, %v727
          %v805 = vadd.f32 %v709, %v732
          %v806 = vadd.f32 %v710, %v737
          %v807 = vadd.f32 %v711, %v742
          %v808 = vadd.f32 %v712, %v747
          %v809 = vadd.f32 %v713, %v752
          %v810 = vadd.f32 %v714, %v757
          %v811 = vadd.f32 %v715, %v762
          %v812 = vadd.f32 %v716, %v767
          %v813 = vadd.f32 %v717, %v772
          %v814 = vadd.f32 %v718, %v777
          %v815 = vadd.f32 %v719, %v782
          %v816 = vadd.f32 %v720, %v787
          %v817 = vadd.f32 %v721, %v792
          %v818 = vadd.f32 %v722, %v797
          %v819 = vadd.f32 %v723, %v802
          %v820 = vmax.f32 %v804, 0.0
          %v821 = vmax.f32 %v805, 0.0
          %v822 = vmax.f32 %v806, 0.0
          %v823 = vmax.f32 %v807, 0.0
          %v824 = vmax.f32 %v808, 0.0
          %v825 = vmax.f32 %v809, 0.0
          %v826 = vmax.f32 %v810, 0.0
          %v827 = vmax.f32 %v811, 0.0
          %v828 = vmax.f32 %v812, 0.0
          %v829 = vmax.f32 %v813, 0.0
          %v830 = vmax.f32 %v814, 0.0
          %v831 = vmax.f32 %v815, 0.0
          %v832 = vmax.f32 %v816, 0.0
          %v833 = vmax.f32 %v817, 0.0
          %v834 = vmax.f32 %v818, 0.0
          %v835 = vmax.f32 %v819, 0.0
          %v836 = vpack.c.bf16 %v821, %v820
          %v837 = vpack.c.bf16 %v823, %v822
          %v838 = vpack.c.bf16 %v825, %v824
          %v839 = vpack.c.bf16 %v827, %v826
          %v840 = vpack.c.bf16 %v829, %v828
          %v841 = vpack.c.bf16 %v831, %v830
          %v842 = vpack.c.bf16 %v833, %v832
          %v843 = vpack.c.bf16 %v835, %v834
          %844 = vst [vmem:[#allocation5] sm:$0xff] %v836
          %845 = vst [vmem:[#allocation5 + $0x8] sm:$0xff] %v837
          %846 = vst [vmem:[#allocation5 + $0x10] sm:$0xff] %v838
          %847 = vst [vmem:[#allocation5 + $0x18] sm:$0xff] %v839
          %848 = vst [vmem:[#allocation5 + $0x20] sm:$0xff] %v840
          %849 = vst [vmem:[#allocation5 + $0x28] sm:$0xff] %v841
          %850 = vst [vmem:[#allocation5 + $0x30] sm:$0xff] %v842
          %851 = vst [vmem:[#allocation5 + $0x38] sm:$0xff] %v843
        $region52: #{tpu_custom_call.1} parent=47 // pred_fallthru
          _
        %v852 = vld [vmem:[%s359] sm:$0x77]
        %v853 = vld [vmem:[%s4] sm:$0xff]
        %v854 = vld [vmem:[%s4 + $0x8] sm:$0xff]
        %v855 = vld [vmem:[%s4 + $0x10] sm:$0xff]
        %v856 = vld [vmem:[%s4 + $0x18] sm:$0xff]
        %v857 = vld [vmem:[%s4 + $0x20] sm:$0xff]
        %v858 = vld [vmem:[%s4 + $0x28] sm:$0xff]
        %v859 = vld [vmem:[%s4 + $0x30] sm:$0xff]
        %v860 = vld [vmem:[%s4 + $0x38] sm:$0xff]
        %v861 = vld [vmem:[%s4 + $0x40] sm:$0xff]
        %v862 = vld [vmem:[%s4 + $0x48] sm:$0xff]
        %v863 = vld [vmem:[%s4 + $0x50] sm:$0xff]
        %v864 = vld [vmem:[%s4 + $0x58] sm:$0xff]
        %v865 = vld [vmem:[%s4 + $0x60] sm:$0xff]
        %v866 = vld [vmem:[%s4 + $0x68] sm:$0xff]
        %v867 = vld [vmem:[%s4 + $0x70] sm:$0xff]
        %v868 = vld [vmem:[%s4 + $0x78] sm:$0xff]
        %v869 = vld [vmem:[%s5] sm:$0xff]
        %v870 = vld [vmem:[%s5 + $0x8] sm:$0xff]
        %v871 = vld [vmem:[%s5 + $0x10] sm:$0xff]
        %v872 = vld [vmem:[%s5 + $0x18] sm:$0xff]
        %v873 = vld [vmem:[%s5 + $0x20] sm:$0xff]
        %v874 = vld [vmem:[%s5 + $0x28] sm:$0xff]
        %v875 = vld [vmem:[%s5 + $0x30] sm:$0xff]
        %v876 = vld [vmem:[%s5 + $0x38] sm:$0xff]
        %v877 = vld [vmem:[%s5 + $0x40] sm:$0xff]
        %v878 = vld [vmem:[%s5 + $0x48] sm:$0xff]
        %v879 = vld [vmem:[%s5 + $0x50] sm:$0xff]
        %v880 = vld [vmem:[%s5 + $0x58] sm:$0xff]
        %v881 = vld [vmem:[%s5 + $0x60] sm:$0xff]
        %v882 = vld [vmem:[%s5 + $0x68] sm:$0xff]
        %v883 = vld [vmem:[%s5 + $0x70] sm:$0xff]
        %v884 = vld [vmem:[%s5 + $0x78] sm:$0xff]
        %886 = vset.pattern.permute.xlu0 0
        %887 = vperm.xlu0 %886, %v853
        %v888 = vpop.permute.xlu0 %887
        %891 = vset.pattern.permute.xlu0 0
        %892 = vperm.xlu0 %891, %v854
        %v893 = vpop.permute.xlu0 %892
        %896 = vset.pattern.permute.xlu0 0
        %897 = vperm.xlu0 %896, %v855
        %v898 = vpop.permute.xlu0 %897
        %901 = vset.pattern.permute.xlu0 0
        %902 = vperm.xlu0 %901, %v856
        %v903 = vpop.permute.xlu0 %902
        %906 = vset.pattern.permute.xlu0 0
        %907 = vperm.xlu0 %906, %v857
        %v908 = vpop.permute.xlu0 %907
        %911 = vset.pattern.permute.xlu0 0
        %912 = vperm.xlu0 %911, %v858
        %v913 = vpop.permute.xlu0 %912
        %916 = vset.pattern.permute.xlu0 0
        %917 = vperm.xlu0 %916, %v859
        %v918 = vpop.permute.xlu0 %917
        %921 = vset.pattern.permute.xlu0 0
        %922 = vperm.xlu0 %921, %v860
        %v923 = vpop.permute.xlu0 %922
        %926 = vset.pattern.permute.xlu0 0
        %927 = vperm.xlu0 %926, %v861
        %v928 = vpop.permute.xlu0 %927
        %931 = vset.pattern.permute.xlu0 0
        %932 = vperm.xlu0 %931, %v862
        %v933 = vpop.permute.xlu0 %932
        %936 = vset.pattern.permute.xlu0 0
        %937 = vperm.xlu0 %936, %v863
        %v938 = vpop.permute.xlu0 %937
        %941 = vset.pattern.permute.xlu0 0
        %942 = vperm.xlu0 %941, %v864
        %v943 = vpop.permute.xlu0 %942
        %946 = vset.pattern.permute.xlu0 0
        %947 = vperm.xlu0 %946, %v865
        %v948 = vpop.permute.xlu0 %947
        %951 = vset.pattern.permute.xlu0 0
        %952 = vperm.xlu0 %951, %v866
        %v953 = vpop.permute.xlu0 %952
        %956 = vset.pattern.permute.xlu0 0
        %957 = vperm.xlu0 %956, %v867
        %v958 = vpop.permute.xlu0 %957
        %961 = vset.pattern.permute.xlu0 0
        %962 = vperm.xlu0 %961, %v868
        %v963 = vpop.permute.xlu0 %962
        %v966 = vlaneseq
        %v967 = vshrl.u32 %v966, 7
        %v968 = vsub.s32 0, %v967
        %v969 = vrot.slane %v852, %v968
        %v970 = vlaneseq
        %v971 = vshrl.u32 %v970, 7
        %v972 = vsub.s32 4, %v971
        %v973 = vrot.slane %v852, %v972
        %v976 = vlaneseq
        %v977 = vshrl.u32 %v976, 7
        %v978 = vsub.s32 0, %v977
        %v979 = vrot.slane %v969, %v978
        %v980 = vlaneseq
        %v981 = vshrl.u32 %v980, 7
        %v982 = vsub.s32 0, %v981
        %v983 = vrot.slane %v973, %v982
        %v984 = vmul.f32 %v888, %v979
        %v985 = vmul.f32 %v888, %v983
        %v986 = vmul.f32 %v893, %v979
        %v987 = vmul.f32 %v893, %v983
        %v988 = vmul.f32 %v898, %v979
        %v989 = vmul.f32 %v898, %v983
        %v990 = vmul.f32 %v903, %v979
        %v991 = vmul.f32 %v903, %v983
        %v992 = vmul.f32 %v908, %v979
        %v993 = vmul.f32 %v908, %v983
        %v994 = vmul.f32 %v913, %v979
        %v995 = vmul.f32 %v913, %v983
        %v996 = vmul.f32 %v918, %v979
        %v997 = vmul.f32 %v918, %v983
        %v998 = vmul.f32 %v923, %v979
        %v999 = vmul.f32 %v923, %v983
        %v1000 = vmul.f32 %v928, %v979
        %v1001 = vmul.f32 %v928, %v983
        %v1002 = vmul.f32 %v933, %v979
        %v1003 = vmul.f32 %v933, %v983
        %v1004 = vmul.f32 %v938, %v979
        %v1005 = vmul.f32 %v938, %v983
        %v1006 = vmul.f32 %v943, %v979
        %v1007 = vmul.f32 %v943, %v983
        %v1008 = vmul.f32 %v948, %v979
        %v1009 = vmul.f32 %v948, %v983
        %v1010 = vmul.f32 %v953, %v979
        %v1011 = vmul.f32 %v953, %v983
        %v1012 = vmul.f32 %v958, %v979
        %v1013 = vmul.f32 %v958, %v983
        %v1014 = vmul.f32 %v963, %v979
        %v1015 = vmul.f32 %v963, %v983
        %v1016 = vadd.f32 %v984, 0.0
        %v1017 = vadd.f32 %v985, 0.0
        %v1018 = vadd.f32 %v986, 0.0
        %v1019 = vadd.f32 %v987, 0.0
        %v1020 = vadd.f32 %v988, 0.0
        %v1021 = vadd.f32 %v989, 0.0
        %v1022 = vadd.f32 %v990, 0.0
        %v1023 = vadd.f32 %v991, 0.0
        %v1024 = vadd.f32 %v992, 0.0
        %v1025 = vadd.f32 %v993, 0.0
        %v1026 = vadd.f32 %v994, 0.0
        %v1027 = vadd.f32 %v995, 0.0
        %v1028 = vadd.f32 %v996, 0.0
        %v1029 = vadd.f32 %v997, 0.0
        %v1030 = vadd.f32 %v998, 0.0
        %v1031 = vadd.f32 %v999, 0.0
        %v1032 = vadd.f32 %v1000, 0.0
        %v1033 = vadd.f32 %v1001, 0.0
        %v1034 = vadd.f32 %v1002, 0.0
        %v1035 = vadd.f32 %v1003, 0.0
        %v1036 = vadd.f32 %v1004, 0.0
        %v1037 = vadd.f32 %v1005, 0.0
        %v1038 = vadd.f32 %v1006, 0.0
        %v1039 = vadd.f32 %v1007, 0.0
        %v1040 = vadd.f32 %v1008, 0.0
        %v1041 = vadd.f32 %v1009, 0.0
        %v1042 = vadd.f32 %v1010, 0.0
        %v1043 = vadd.f32 %v1011, 0.0
        %v1044 = vadd.f32 %v1012, 0.0
        %v1045 = vadd.f32 %v1013, 0.0
        %v1046 = vadd.f32 %v1014, 0.0
        %v1047 = vadd.f32 %v1015, 0.0
        %1048 = vset.pattern.permute.xlu0 1
        %1049 = vperm.xlu0 %1048, %v853
        %v1050 = vpop.permute.xlu0 %1049
        %1052 = vset.pattern.permute.xlu0 1
        %1053 = vperm.xlu0 %1052, %v854
        %v1054 = vpop.permute.xlu0 %1053
        %1056 = vset.pattern.permute.xlu0 1
        %1057 = vperm.xlu0 %1056, %v855
        %v1058 = vpop.permute.xlu0 %1057
        %1060 = vset.pattern.permute.xlu0 1
        %1061 = vperm.xlu0 %1060, %v856
        %v1062 = vpop.permute.xlu0 %1061
        %1064 = vset.pattern.permute.xlu0 1
        %1065 = vperm.xlu0 %1064, %v857
        %v1066 = vpop.permute.xlu0 %1065
        %1068 = vset.pattern.permute.xlu0 1
        %1069 = vperm.xlu0 %1068, %v858
        %v1070 = vpop.permute.xlu0 %1069
        %1072 = vset.pattern.permute.xlu0 1
        %1073 = vperm.xlu0 %1072, %v859
        %v1074 = vpop.permute.xlu0 %1073
        %1076 = vset.pattern.permute.xlu0 1
        %1077 = vperm.xlu0 %1076, %v860
        %v1078 = vpop.permute.xlu0 %1077
        %1080 = vset.pattern.permute.xlu0 1
        %1081 = vperm.xlu0 %1080, %v861
        %v1082 = vpop.permute.xlu0 %1081
        %1084 = vset.pattern.permute.xlu0 1
        %1085 = vperm.xlu0 %1084, %v862
        %v1086 = vpop.permute.xlu0 %1085
        %1088 = vset.pattern.permute.xlu0 1
        %1089 = vperm.xlu0 %1088, %v863
        %v1090 = vpop.permute.xlu0 %1089
        %1092 = vset.pattern.permute.xlu0 1
        %1093 = vperm.xlu0 %1092, %v864
        %v1094 = vpop.permute.xlu0 %1093
        %1096 = vset.pattern.permute.xlu0 1
        %1097 = vperm.xlu0 %1096, %v865
        %v1098 = vpop.permute.xlu0 %1097
        %1100 = vset.pattern.permute.xlu0 1
        %1101 = vperm.xlu0 %1100, %v866
        %v1102 = vpop.permute.xlu0 %1101
        %1104 = vset.pattern.permute.xlu0 1
        %1105 = vperm.xlu0 %1104, %v867
        %v1106 = vpop.permute.xlu0 %1105
        %1108 = vset.pattern.permute.xlu0 1
        %1109 = vperm.xlu0 %1108, %v868
        %v1110 = vpop.permute.xlu0 %1109
        %v1112 = vlaneseq
        %v1113 = vshrl.u32 %v1112, 7
        %v1114 = vsub.s32 1, %v1113
        %v1115 = vrot.slane %v852, %v1114
        %v1116 = vlaneseq
        %v1117 = vshrl.u32 %v1116, 7
        %v1118 = vsub.s32 5, %v1117
        %v1119 = vrot.slane %v852, %v1118
        %v1122 = vlaneseq
        %v1123 = vshrl.u32 %v1122, 7
        %v1124 = vsub.s32 1, %v1123
        %v1125 = vrot.slane %v1115, %v1124
        %v1126 = vlaneseq
        %v1127 = vshrl.u32 %v1126, 7
        %v1128 = vsub.s32 1, %v1127
        %v1129 = vrot.slane %v1119, %v1128
        %v1130 = vmul.f32 %v1050, %v1125
        %v1131 = vmul.f32 %v1050, %v1129
        %v1132 = vmul.f32 %v1054, %v1125
        %v1133 = vmul.f32 %v1054, %v1129
        %v1134 = vmul.f32 %v1058, %v1125
        %v1135 = vmul.f32 %v1058, %v1129
        %v1136 = vmul.f32 %v1062, %v1125
        %v1137 = vmul.f32 %v1062, %v1129
        %v1138 = vmul.f32 %v1066, %v1125
        %v1139 = vmul.f32 %v1066, %v1129
        %v1140 = vmul.f32 %v1070, %v1125
        %v1141 = vmul.f32 %v1070, %v1129
        %v1142 = vmul.f32 %v1074, %v1125
        %v1143 = vmul.f32 %v1074, %v1129
        %v1144 = vmul.f32 %v1078, %v1125
        %v1145 = vmul.f32 %v1078, %v1129
        %v1146 = vmul.f32 %v1082, %v1125
        %v1147 = vmul.f32 %v1082, %v1129
        %v1148 = vmul.f32 %v1086, %v1125
        %v1149 = vmul.f32 %v1086, %v1129
        %v1150 = vmul.f32 %v1090, %v1125
        %v1151 = vmul.f32 %v1090, %v1129
        %v1152 = vmul.f32 %v1094, %v1125
        %v1153 = vmul.f32 %v1094, %v1129
        %v1154 = vmul.f32 %v1098, %v1125
        %v1155 = vmul.f32 %v1098, %v1129
        %v1156 = vmul.f32 %v1102, %v1125
        %v1157 = vmul.f32 %v1102, %v1129
        %v1158 = vmul.f32 %v1106, %v1125
        %v1159 = vmul.f32 %v1106, %v1129
        %v1160 = vmul.f32 %v1110, %v1125
        %v1161 = vmul.f32 %v1110, %v1129
        %v1162 = vadd.f32 %v1016, %v1130
        %v1163 = vadd.f32 %v1017, %v1131
        %v1164 = vadd.f32 %v1018, %v1132
        %v1165 = vadd.f32 %v1019, %v1133
        %v1166 = vadd.f32 %v1020, %v1134
        %v1167 = vadd.f32 %v1021, %v1135
        %v1168 = vadd.f32 %v1022, %v1136
        %v1169 = vadd.f32 %v1023, %v1137
        %v1170 = vadd.f32 %v1024, %v1138
        %v1171 = vadd.f32 %v1025, %v1139
        %v1172 = vadd.f32 %v1026, %v1140
        %v1173 = vadd.f32 %v1027, %v1141
        %v1174 = vadd.f32 %v1028, %v1142
        %v1175 = vadd.f32 %v1029, %v1143
        %v1176 = vadd.f32 %v1030, %v1144
        %v1177 = vadd.f32 %v1031, %v1145
        %v1178 = vadd.f32 %v1032, %v1146
        %v1179 = vadd.f32 %v1033, %v1147
        %v1180 = vadd.f32 %v1034, %v1148
        %v1181 = vadd.f32 %v1035, %v1149
        %v1182 = vadd.f32 %v1036, %v1150
        %v1183 = vadd.f32 %v1037, %v1151
        %v1184 = vadd.f32 %v1038, %v1152
        %v1185 = vadd.f32 %v1039, %v1153
        %v1186 = vadd.f32 %v1040, %v1154
        %v1187 = vadd.f32 %v1041, %v1155
        %v1188 = vadd.f32 %v1042, %v1156
        %v1189 = vadd.f32 %v1043, %v1157
        %v1190 = vadd.f32 %v1044, %v1158
        %v1191 = vadd.f32 %v1045, %v1159
        %v1192 = vadd.f32 %v1046, %v1160
        %v1193 = vadd.f32 %v1047, %v1161
        %1194 = vset.pattern.permute.xlu0 2
        %1195 = vperm.xlu0 %1194, %v853
        %v1196 = vpop.permute.xlu0 %1195
        %1198 = vset.pattern.permute.xlu0 2
        %1199 = vperm.xlu0 %1198, %v854
        %v1200 = vpop.permute.xlu0 %1199
        %1202 = vset.pattern.permute.xlu0 2
        %1203 = vperm.xlu0 %1202, %v855
        %v1204 = vpop.permute.xlu0 %1203
        %1206 = vset.pattern.permute.xlu0 2
        %1207 = vperm.xlu0 %1206, %v856
        %v1208 = vpop.permute.xlu0 %1207
        %1210 = vset.pattern.permute.xlu0 2
        %1211 = vperm.xlu0 %1210, %v857
        %v1212 = vpop.permute.xlu0 %1211
        %1214 = vset.pattern.permute.xlu0 2
        %1215 = vperm.xlu0 %1214, %v858
        %v1216 = vpop.permute.xlu0 %1215
        %1218 = vset.pattern.permute.xlu0 2
        %1219 = vperm.xlu0 %1218, %v859
        %v1220 = vpop.permute.xlu0 %1219
        %1222 = vset.pattern.permute.xlu0 2
        %1223 = vperm.xlu0 %1222, %v860
        %v1224 = vpop.permute.xlu0 %1223
        %1226 = vset.pattern.permute.xlu0 2
        %1227 = vperm.xlu0 %1226, %v861
        %v1228 = vpop.permute.xlu0 %1227
        %1230 = vset.pattern.permute.xlu0 2
        %1231 = vperm.xlu0 %1230, %v862
        %v1232 = vpop.permute.xlu0 %1231
        %1234 = vset.pattern.permute.xlu0 2
        %1235 = vperm.xlu0 %1234, %v863
        %v1236 = vpop.permute.xlu0 %1235
        %1238 = vset.pattern.permute.xlu0 2
        %1239 = vperm.xlu0 %1238, %v864
        %v1240 = vpop.permute.xlu0 %1239
        %1242 = vset.pattern.permute.xlu0 2
        %1243 = vperm.xlu0 %1242, %v865
        %v1244 = vpop.permute.xlu0 %1243
        %1246 = vset.pattern.permute.xlu0 2
        %1247 = vperm.xlu0 %1246, %v866
        %v1248 = vpop.permute.xlu0 %1247
        %1250 = vset.pattern.permute.xlu0 2
        %1251 = vperm.xlu0 %1250, %v867
        %v1252 = vpop.permute.xlu0 %1251
        %1254 = vset.pattern.permute.xlu0 2
        %1255 = vperm.xlu0 %1254, %v868
        %v1256 = vpop.permute.xlu0 %1255
        %v1258 = vlaneseq
        %v1259 = vshrl.u32 %v1258, 7
        %v1260 = vsub.s32 2, %v1259
        %v1261 = vrot.slane %v852, %v1260
        %v1262 = vlaneseq
        %v1263 = vshrl.u32 %v1262, 7
        %v1264 = vsub.s32 6, %v1263
        %v1265 = vrot.slane %v852, %v1264
        %v1268 = vlaneseq
        %v1269 = vshrl.u32 %v1268, 7
        %v1270 = vsub.s32 2, %v1269
        %v1271 = vrot.slane %v1261, %v1270
        %v1272 = vlaneseq
        %v1273 = vshrl.u32 %v1272, 7
        %v1274 = vsub.s32 2, %v1273
        %v1275 = vrot.slane %v1265, %v1274
        %v1276 = vmul.f32 %v1196, %v1271
        %v1277 = vmul.f32 %v1196, %v1275
        %v1278 = vmul.f32 %v1200, %v1271
        %v1279 = vmul.f32 %v1200, %v1275
        %v1280 = vmul.f32 %v1204, %v1271
        %v1281 = vmul.f32 %v1204, %v1275
        %v1282 = vmul.f32 %v1208, %v1271
        %v1283 = vmul.f32 %v1208, %v1275
        %v1284 = vmul.f32 %v1212, %v1271
        %v1285 = vmul.f32 %v1212, %v1275
        %v1286 = vmul.f32 %v1216, %v1271
        %v1287 = vmul.f32 %v1216, %v1275
        %v1288 = vmul.f32 %v1220, %v1271
        %v1289 = vmul.f32 %v1220, %v1275
        %v1290 = vmul.f32 %v1224, %v1271
        %v1291 = vmul.f32 %v1224, %v1275
        %v1292 = vmul.f32 %v1228, %v1271
        %v1293 = vmul.f32 %v1228, %v1275
        %v1294 = vmul.f32 %v1232, %v1271
        %v1295 = vmul.f32 %v1232, %v1275
        %v1296 = vmul.f32 %v1236, %v1271
        %v1297 = vmul.f32 %v1236, %v1275
        %v1298 = vmul.f32 %v1240, %v1271
        %v1299 = vmul.f32 %v1240, %v1275
        %v1300 = vmul.f32 %v1244, %v1271
        %v1301 = vmul.f32 %v1244, %v1275
        %v1302 = vmul.f32 %v1248, %v1271
        %v1303 = vmul.f32 %v1248, %v1275
        %v1304 = vmul.f32 %v1252, %v1271
        %v1305 = vmul.f32 %v1252, %v1275
        %v1306 = vmul.f32 %v1256, %v1271
        %v1307 = vmul.f32 %v1256, %v1275
        %v1308 = vadd.f32 %v1162, %v1276
        %v1309 = vadd.f32 %v1163, %v1277
        %v1310 = vadd.f32 %v1164, %v1278
        %v1311 = vadd.f32 %v1165, %v1279
        %v1312 = vadd.f32 %v1166, %v1280
        %v1313 = vadd.f32 %v1167, %v1281
        %v1314 = vadd.f32 %v1168, %v1282
        %v1315 = vadd.f32 %v1169, %v1283
        %v1316 = vadd.f32 %v1170, %v1284
        %v1317 = vadd.f32 %v1171, %v1285
        %v1318 = vadd.f32 %v1172, %v1286
        %v1319 = vadd.f32 %v1173, %v1287
        %v1320 = vadd.f32 %v1174, %v1288
        %v1321 = vadd.f32 %v1175, %v1289
        %v1322 = vadd.f32 %v1176, %v1290
        %v1323 = vadd.f32 %v1177, %v1291
        %v1324 = vadd.f32 %v1178, %v1292
        %v1325 = vadd.f32 %v1179, %v1293
        %v1326 = vadd.f32 %v1180, %v1294
        %v1327 = vadd.f32 %v1181, %v1295
        %v1328 = vadd.f32 %v1182, %v1296
        %v1329 = vadd.f32 %v1183, %v1297
        %v1330 = vadd.f32 %v1184, %v1298
        %v1331 = vadd.f32 %v1185, %v1299
        %v1332 = vadd.f32 %v1186, %v1300
        %v1333 = vadd.f32 %v1187, %v1301
        %v1334 = vadd.f32 %v1188, %v1302
        %v1335 = vadd.f32 %v1189, %v1303
        %v1336 = vadd.f32 %v1190, %v1304
        %v1337 = vadd.f32 %v1191, %v1305
        %v1338 = vadd.f32 %v1192, %v1306
        %v1339 = vadd.f32 %v1193, %v1307
        %1341 = vset.pattern.permute.xlu0 0
        %1342 = vperm.xlu0 %1341, %v869
        %v1343 = vpop.permute.xlu0 %1342
        %1346 = vset.pattern.permute.xlu0 0
        %1347 = vperm.xlu0 %1346, %v870
        %v1348 = vpop.permute.xlu0 %1347
        %1351 = vset.pattern.permute.xlu0 0
        %1352 = vperm.xlu0 %1351, %v871
        %v1353 = vpop.permute.xlu0 %1352
        %1356 = vset.pattern.permute.xlu0 0
        %1357 = vperm.xlu0 %1356, %v872
        %v1358 = vpop.permute.xlu0 %1357
        %1361 = vset.pattern.permute.xlu0 0
        %1362 = vperm.xlu0 %1361, %v873
        %v1363 = vpop.permute.xlu0 %1362
        %1366 = vset.pattern.permute.xlu0 0
        %1367 = vperm.xlu0 %1366, %v874
        %v1368 = vpop.permute.xlu0 %1367
        %1371 = vset.pattern.permute.xlu0 0
        %1372 = vperm.xlu0 %1371, %v875
        %v1373 = vpop.permute.xlu0 %1372
        %1376 = vset.pattern.permute.xlu0 0
        %1377 = vperm.xlu0 %1376, %v876
        %v1378 = vpop.permute.xlu0 %1377
        %1381 = vset.pattern.permute.xlu0 0
        %1382 = vperm.xlu0 %1381, %v877
        %v1383 = vpop.permute.xlu0 %1382
        %1386 = vset.pattern.permute.xlu0 0
        %1387 = vperm.xlu0 %1386, %v878
        %v1388 = vpop.permute.xlu0 %1387
        %1391 = vset.pattern.permute.xlu0 0
        %1392 = vperm.xlu0 %1391, %v879
        %v1393 = vpop.permute.xlu0 %1392
        %1396 = vset.pattern.permute.xlu0 0
        %1397 = vperm.xlu0 %1396, %v880
        %v1398 = vpop.permute.xlu0 %1397
        %1401 = vset.pattern.permute.xlu0 0
        %1402 = vperm.xlu0 %1401, %v881
        %v1403 = vpop.permute.xlu0 %1402
        %1406 = vset.pattern.permute.xlu0 0
        %1407 = vperm.xlu0 %1406, %v882
        %v1408 = vpop.permute.xlu0 %1407
        %1411 = vset.pattern.permute.xlu0 0
        %1412 = vperm.xlu0 %1411, %v883
        %v1413 = vpop.permute.xlu0 %1412
        %1416 = vset.pattern.permute.xlu0 0
        %1417 = vperm.xlu0 %1416, %v884
        %v1418 = vpop.permute.xlu0 %1417
        %v1420 = vadd.f32 %v1308, %v1343
        %v1421 = vadd.f32 %v1309, %v1343
        %v1422 = vadd.f32 %v1310, %v1348
        %v1423 = vadd.f32 %v1311, %v1348
        %v1424 = vadd.f32 %v1312, %v1353
        %v1425 = vadd.f32 %v1313, %v1353
        %v1426 = vadd.f32 %v1314, %v1358
        %v1427 = vadd.f32 %v1315, %v1358
        %v1428 = vadd.f32 %v1316, %v1363
        %v1429 = vadd.f32 %v1317, %v1363
        %v1430 = vadd.f32 %v1318, %v1368
        %v1431 = vadd.f32 %v1319, %v1368
        %v1432 = vadd.f32 %v1320, %v1373
        %v1433 = vadd.f32 %v1321, %v1373
        %v1434 = vadd.f32 %v1322, %v1378
        %v1435 = vadd.f32 %v1323, %v1378
        %v1436 = vadd.f32 %v1324, %v1383
        %v1437 = vadd.f32 %v1325, %v1383
        %v1438 = vadd.f32 %v1326, %v1388
        %v1439 = vadd.f32 %v1327, %v1388
        %v1440 = vadd.f32 %v1328, %v1393
        %v1441 = vadd.f32 %v1329, %v1393
        %v1442 = vadd.f32 %v1330, %v1398
        %v1443 = vadd.f32 %v1331, %v1398
        %v1444 = vadd.f32 %v1332, %v1403
        %v1445 = vadd.f32 %v1333, %v1403
        %v1446 = vadd.f32 %v1334, %v1408
        %v1447 = vadd.f32 %v1335, %v1408
        %v1448 = vadd.f32 %v1336, %v1413
        %v1449 = vadd.f32 %v1337, %v1413
        %v1450 = vadd.f32 %v1338, %v1418
        %v1451 = vadd.f32 %v1339, %v1418
        %v1452 = vmax.f32 %v1420, 0.0
        %v1453 = vmax.f32 %v1421, 0.0
        %v1454 = vmax.f32 %v1422, 0.0
        %v1455 = vmax.f32 %v1423, 0.0
        %v1456 = vmax.f32 %v1424, 0.0
        %v1457 = vmax.f32 %v1425, 0.0
        %v1458 = vmax.f32 %v1426, 0.0
        %v1459 = vmax.f32 %v1427, 0.0
        %v1460 = vmax.f32 %v1428, 0.0
        %v1461 = vmax.f32 %v1429, 0.0
        %v1462 = vmax.f32 %v1430, 0.0
        %v1463 = vmax.f32 %v1431, 0.0
        %v1464 = vmax.f32 %v1432, 0.0
        %v1465 = vmax.f32 %v1433, 0.0
        %v1466 = vmax.f32 %v1434, 0.0
        %v1467 = vmax.f32 %v1435, 0.0
        %v1468 = vmax.f32 %v1436, 0.0
        %v1469 = vmax.f32 %v1437, 0.0
        %v1470 = vmax.f32 %v1438, 0.0
        %v1471 = vmax.f32 %v1439, 0.0
        %v1472 = vmax.f32 %v1440, 0.0
        %v1473 = vmax.f32 %v1441, 0.0
        %v1474 = vmax.f32 %v1442, 0.0
        %v1475 = vmax.f32 %v1443, 0.0
        %v1476 = vmax.f32 %v1444, 0.0
        %v1477 = vmax.f32 %v1445, 0.0
        %v1478 = vmax.f32 %v1446, 0.0
        %v1479 = vmax.f32 %v1447, 0.0
        %v1480 = vmax.f32 %v1448, 0.0
        %v1481 = vmax.f32 %v1449, 0.0
        %v1482 = vmax.f32 %v1450, 0.0
        %v1483 = vmax.f32 %v1451, 0.0
        %v1484 = vpack.c.bf16 %v1454, %v1452
        %v1485 = vpack.c.bf16 %v1455, %v1453
        %v1486 = vpack.c.bf16 %v1458, %v1456
        %v1487 = vpack.c.bf16 %v1459, %v1457
        %v1488 = vpack.c.bf16 %v1462, %v1460
        %v1489 = vpack.c.bf16 %v1463, %v1461
        %v1490 = vpack.c.bf16 %v1466, %v1464
        %v1491 = vpack.c.bf16 %v1467, %v1465
        %v1492 = vpack.c.bf16 %v1470, %v1468
        %v1493 = vpack.c.bf16 %v1471, %v1469
        %v1494 = vpack.c.bf16 %v1474, %v1472
        %v1495 = vpack.c.bf16 %v1475, %v1473
        %v1496 = vpack.c.bf16 %v1478, %v1476
        %v1497 = vpack.c.bf16 %v1479, %v1477
        %v1498 = vpack.c.bf16 %v1482, %v1480
        %v1499 = vpack.c.bf16 %v1483, %v1481
        %v1500 = vld [vmem:[#allocation5] sm:$0xff]
        %v1501 = vld [vmem:[#allocation5 + $0x8] sm:$0xff]
        %v1502 = vld [vmem:[#allocation5 + $0x10] sm:$0xff]
        %v1503 = vld [vmem:[#allocation5 + $0x18] sm:$0xff]
        %v1504 = vld [vmem:[#allocation5 + $0x20] sm:$0xff]
        %v1505 = vld [vmem:[#allocation5 + $0x28] sm:$0xff]
        %v1506 = vld [vmem:[#allocation5 + $0x30] sm:$0xff]
        %v1507 = vld [vmem:[#allocation5 + $0x38] sm:$0xff]
        %1508 = vxpose.xlu0.c.b16.start [1/8] %v1484, 128
        %1509 = vxpose.xlu0.c.b16.cont [2/8] %v1486, 128
        %1510 = vxpose.xlu0.c.b16.cont [3/8] %v1488, 128
        %1511 = vxpose.xlu0.c.b16.cont [4/8] %v1490, 128
        %1512 = vxpose.xlu0.c.b16.cont [5/8] %v1492, 128
        %1513 = vxpose.xlu0.c.b16.cont [6/8] %v1494, 128
        %1514 = vxpose.xlu0.c.b16.cont [7/8] %v1496, 128
        %1515 = vxpose.xlu0.c.b16.end [8/8] %v1498, 128
        %v1516 = vpop.trf.xlu0
        %v1517 = vpop.trf.xlu0
        %v1518 = vpop.trf.xlu0
        %v1519 = vpop.trf.xlu0
        %v1520 = vpop.trf.xlu0
        %v1521 = vpop.trf.xlu0
        %v1522 = vpop.trf.xlu0
        %v1523 = vpop.trf.xlu0
        %1524 = vxpose.xlu0.c.b16.start [1/8] %v1485, 128
        %1525 = vxpose.xlu0.c.b16.cont [2/8] %v1487, 128
        %1526 = vxpose.xlu0.c.b16.cont [3/8] %v1489, 128
        %1527 = vxpose.xlu0.c.b16.cont [4/8] %v1491, 128
        %1528 = vxpose.xlu0.c.b16.cont [5/8] %v1493, 128
        %1529 = vxpose.xlu0.c.b16.cont [6/8] %v1495, 128
        %1530 = vxpose.xlu0.c.b16.cont [7/8] %v1497, 128
        %1531 = vxpose.xlu0.c.b16.end [8/8] %v1499, 128
        %v1532 = vpop.trf.xlu0
        %v1533 = vpop.trf.xlu0
        %v1534 = vpop.trf.xlu0
        %v1535 = vpop.trf.xlu0
        %v1536 = vpop.trf.xlu0
        %v1537 = vpop.trf.xlu0
        %v1538 = vpop.trf.xlu0
        %v1539 = vpop.trf.xlu0
        %1540 = vmatprep.subr.bf16.mxu0 0
        %1541 = vmatpush1.bf16.msra.mxu0 %v1500
        %1542 = vmatprep.subr.bf16.mxu0 0
        %1543 = vmatpush1.bf16.msra.mxu0 %v1501
        %1544 = vmatprep.subr.bf16.mxu0 0
        %1545 = vmatpush1.bf16.msra.mxu0 %v1502
        %1546 = vmatprep.subr.bf16.mxu0 0
        %1547 = vmatpush1.bf16.msra.mxu0 %v1503
        %1548 = vmatprep.subr.bf16.mxu0 0
        %1549 = vmatpush1.bf16.msra.mxu0 %v1504
        %1550 = vmatprep.subr.bf16.mxu0 0
        %1551 = vmatpush1.bf16.msra.mxu0 %v1505
        %1552 = vmatprep.subr.bf16.mxu0 0
        %1553 = vmatpush1.bf16.msra.mxu0 %v1506
        %1554 = vmatprep.subr.bf16.mxu0 0
        %1555 = vmatpush1.bf16.msra.mxu0 %v1507
        %1556 = vmatprep.subr.bf16.mxu0 0
        %1557 = vmatpush1.bf16.msra.mxu0 0
        %1558 = vmatprep.subr.bf16.mxu0 0
        %1559 = vmatpush1.bf16.msra.mxu0 0
        %1560 = vmatprep.subr.bf16.mxu0 0
        %1561 = vmatpush1.bf16.msra.mxu0 0
        %1562 = vmatprep.subr.bf16.mxu0 0
        %1563 = vmatpush1.bf16.msra.mxu0 0
        %1564 = vmatprep.subr.bf16.mxu0 0
        %1565 = vmatpush1.bf16.msra.mxu0 0
        %1566 = vmatprep.subr.bf16.mxu0 0
        %1567 = vmatpush1.bf16.msra.mxu0 0
        %1568 = vmatprep.subr.bf16.mxu0 0
        %1569 = vmatpush1.bf16.msra.mxu0 0
        %1570 = vmatprep.subr.bf16.mxu0 0
        %1571 = vmatpush1.bf16.msra.mxu0 0
        %1572 = vmatprep.mubr.bf16.mxu0 0
        %1573 = vmatmul.mubr.bf16.gmra.mrb[0].mxu0 %v1516
        %v1574 = vpop.f32.mrb[0].mxu0
        %v1575 = vadd.f32 0.0, %v1574
        %v1576 = vpop.f32.mrb[0].mxu0
        %v1577 = vpop.f32.mrb[0].mxu0
        %v1578 = vadd.f32 0.0, %v1577
        %v1579 = vpop.f32.mrb[0].mxu0
        %1580 = vmatprep.mubr.bf16.mxu0 0
        %1581 = vmatmul.mubr.bf16.gmra.mrb[0].mxu0 %v1517
        %v1582 = vpop.f32.mrb[0].mxu0
        %v1583 = vadd.f32 0.0, %v1582
        %v1584 = vpop.f32.mrb[0].mxu0
        %v1585 = vpop.f32.mrb[0].mxu0
        %v1586 = vadd.f32 0.0, %v1585
        %v1587 = vpop.f32.mrb[0].mxu0
        %1588 = vmatprep.mubr.bf16.mxu0 0
        %1589 = vmatmul.mubr.bf16.gmra.mrb[0].mxu0 %v1518
        %v1590 = vpop.f32.mrb[0].mxu0
        %v1591 = vadd.f32 0.0, %v1590
        %v1592 = vpop.f32.mrb[0].mxu0
        %v1593 = vpop.f32.mrb[0].mxu0
        %v1594 = vadd.f32 0.0, %v1593
        %v1595 = vpop.f32.mrb[0].mxu0
        %1596 = vmatprep.mubr.bf16.mxu0 0
        %1597 = vmatmul.mubr.bf16.gmra.mrb[0].mxu0 %v1519
        %v1598 = vpop.f32.mrb[0].mxu0
        %v1599 = vadd.f32 0.0, %v1598
        %v1600 = vpop.f32.mrb[0].mxu0
        %v1601 = vpop.f32.mrb[0].mxu0
        %v1602 = vadd.f32 0.0, %v1601
        %v1603 = vpop.f32.mrb[0].mxu0
        %1604 = vmatprep.mubr.bf16.mxu0 0
        %1605 = vmatmul.mubr.bf16.gmra.mrb[0].mxu0 %v1520
        %v1606 = vpop.f32.mrb[0].mxu0
        %v1607 = vadd.f32 0.0, %v1606
        %v1608 = vpop.f32.mrb[0].mxu0
        %v1609 = vpop.f32.mrb[0].mxu0
        %v1610 = vadd.f32 0.0, %v1609
        %v1611 = vpop.f32.mrb[0].mxu0
        %1612 = vmatprep.mubr.bf16.mxu0 0
        %1613 = vmatmul.mubr.bf16.gmra.mrb[0].mxu0 %v1521
        %v1614 = vpop.f32.mrb[0].mxu0
        %v1615 = vadd.f32 0.0, %v1614
        %v1616 = vpop.f32.mrb[0].mxu0
        %v1617 = vpop.f32.mrb[0].mxu0
        %v1618 = vadd.f32 0.0, %v1617
        %v1619 = vpop.f32.mrb[0].mxu0
        %1620 = vmatprep.mubr.bf16.mxu0 0
        %1621 = vmatmul.mubr.bf16.gmra.mrb[0].mxu0 %v1522
        %v1622 = vpop.f32.mrb[0].mxu0
        %v1623 = vadd.f32 0.0, %v1622
        %v1624 = vpop.f32.mrb[0].mxu0
        %v1625 = vpop.f32.mrb[0].mxu0
        %v1626 = vadd.f32 0.0, %v1625
        %v1627 = vpop.f32.mrb[0].mxu0
        %1628 = vmatprep.mubr.bf16.mxu0 0
        %1629 = vmatmul.mubr.bf16.gmra.mrb[0].mxu0 %v1523
        %v1630 = vpop.f32.mrb[0].mxu0
        %v1631 = vadd.f32 0.0, %v1630
        %v1632 = vpop.f32.mrb[0].mxu0
        %v1633 = vpop.f32.mrb[0].mxu0
        %v1634 = vadd.f32 0.0, %v1633
        %v1635 = vpop.f32.mrb[0].mxu0
        %1636 = vmatprep.mubr.bf16.mxu0 0
        %1637 = vmatmul.mubr.bf16.gmra.mrb[0].mxu0 %v1532
        %v1638 = vpop.f32.mrb[0].mxu0
        %v1639 = vadd.f32 0.0, %v1638
        %v1640 = vpop.f32.mrb[0].mxu0
        %v1641 = vpop.f32.mrb[0].mxu0
        %v1642 = vadd.f32 0.0, %v1641
        %v1643 = vpop.f32.mrb[0].mxu0
        %1644 = vmatprep.mubr.bf16.mxu0 0
        %1645 = vmatmul.mubr.bf16.gmra.mrb[0].mxu0 %v1533
        %v1646 = vpop.f32.mrb[0].mxu0
        %v1647 = vadd.f32 0.0, %v1646
        %v1648 = vpop.f32.mrb[0].mxu0
        %v1649 = vpop.f32.mrb[0].mxu0
        %v1650 = vadd.f32 0.0, %v1649
        %v1651 = vpop.f32.mrb[0].mxu0
        %1652 = vmatprep.mubr.bf16.mxu0 0
        %1653 = vmatmul.mubr.bf16.gmra.mrb[0].mxu0 %v1534
        %v1654 = vpop.f32.mrb[0].mxu0
        %v1655 = vadd.f32 0.0, %v1654
        %v1656 = vpop.f32.mrb[0].mxu0
        %v1657 = vpop.f32.mrb[0].mxu0
        %v1658 = vadd.f32 0.0, %v1657
        %v1659 = vpop.f32.mrb[0].mxu0
        %1660 = vmatprep.mubr.bf16.mxu0 0
        %1661 = vmatmul.mubr.bf16.gmra.mrb[0].mxu0 %v1535
        %v1662 = vpop.f32.mrb[0].mxu0
        %v1663 = vadd.f32 0.0, %v1662
        %v1664 = vpop.f32.mrb[0].mxu0
        %v1665 = vpop.f32.mrb[0].mxu0
        %v1666 = vadd.f32 0.0, %v1665
        %v1667 = vpop.f32.mrb[0].mxu0
        %1668 = vmatprep.mubr.bf16.mxu0 0
        %1669 = vmatmul.mubr.bf16.gmra.mrb[0].mxu0 %v1536
        %v1670 = vpop.f32.mrb[0].mxu0
        %v1671 = vadd.f32 0.0, %v1670
        %v1672 = vpop.f32.mrb[0].mxu0
        %v1673 = vpop.f32.mrb[0].mxu0
        %v1674 = vadd.f32 0.0, %v1673
        %v1675 = vpop.f32.mrb[0].mxu0
        %1676 = vmatprep.mubr.bf16.mxu0 0
        %1677 = vmatmul.mubr.bf16.gmra.mrb[0].mxu0 %v1537
        %v1678 = vpop.f32.mrb[0].mxu0
        %v1679 = vadd.f32 0.0, %v1678
        %v1680 = vpop.f32.mrb[0].mxu0
        %v1681 = vpop.f32.mrb[0].mxu0
        %v1682 = vadd.f32 0.0, %v1681
        %v1683 = vpop.f32.mrb[0].mxu0
        %1684 = vmatprep.mubr.bf16.mxu0 0
        %1685 = vmatmul.mubr.bf16.gmra.mrb[0].mxu0 %v1538
        %v1686 = vpop.f32.mrb[0].mxu0
        %v1687 = vadd.f32 0.0, %v1686
        %v1688 = vpop.f32.mrb[0].mxu0
        %v1689 = vpop.f32.mrb[0].mxu0
        %v1690 = vadd.f32 0.0, %v1689
        %v1691 = vpop.f32.mrb[0].mxu0
        %1692 = vmatprep.mubr.bf16.mxu0 0
        %1693 = vmatmul.mubr.bf16.gmra.mrb[0].mxu0 %v1539
        %v1694 = vpop.f32.mrb[0].mxu0
        %v1695 = vadd.f32 0.0, %v1694
        %v1696 = vpop.f32.mrb[0].mxu0
        %v1697 = vpop.f32.mrb[0].mxu0
        %v1698 = vadd.f32 0.0, %v1697
        %v1699 = vpop.f32.mrb[0].mxu0
        %1700 = vdwg.mxu0
        %v1701 = vld [vmem:[#allocation2] sm:$0x1]
        %v1702 = vmax.f32 %v1575, %v1591
        %v1703 = vmax.f32 %v1578, %v1594
        %v1704 = vmax.f32 %v1583, %v1599
        %v1705 = vmax.f32 %v1586, %v1602
        %v1706 = vmax.f32 %v1702, %v1607
        %v1707 = vmax.f32 %v1703, %v1610
        %v1708 = vmax.f32 %v1704, %v1615
        %v1709 = vmax.f32 %v1705, %v1618
        %v1710 = vmax.f32 %v1706, %v1623
        %v1711 = vmax.f32 %v1707, %v1626
        %v1712 = vmax.f32 %v1708, %v1631
        %v1713 = vmax.f32 %v1709, %v1634
        %v1714 = vmax.f32 %v1710, %v1639
        %v1715 = vmax.f32 %v1711, %v1642
        %v1716 = vmax.f32 %v1712, %v1647
        %v1717 = vmax.f32 %v1713, %v1650
        %v1718 = vmax.f32 %v1714, %v1655
        %v1719 = vmax.f32 %v1715, %v1658
        %v1720 = vmax.f32 %v1716, %v1663
        %v1721 = vmax.f32 %v1717, %v1666
        %v1722 = vmax.f32 %v1718, %v1671
        %v1723 = vmax.f32 %v1719, %v1674
        %v1724 = vmax.f32 %v1720, %v1679
        %v1725 = vmax.f32 %v1721, %v1682
        %v1726 = vmax.f32 %v1722, %v1687
        %v1727 = vmax.f32 %v1723, %v1690
        %v1728 = vmax.f32 %v1724, %v1695
        %v1729 = vmax.f32 %v1725, %v1698
        %v1730 = vmax.f32 %v1726, %v1727
        %v1731 = vmax.f32 %v1728, %v1729
        %v1732 = vmax.f32 %v1730, %v1731
        %v1733 = vrot.slane %v1732, 4
        %v1734 = vmax.f32 %v1732, %v1733
        %v1735 = vrot.slane %v1734, 2
        %v1736 = vmax.f32 %v1734, %v1735
        %v1737 = vrot.slane %v1736, 1
        %v1738 = vmax.f32 %v1736, %v1737
        %v1739 = vmax.f32 %v1701, %v1738
        %v1740 = vsub.f32 %v1701, %v1739
        %v1741 = vmul.f32 %v1740, 1.442695
        %v1742 = vpow.pop %v1741
        %v1744 = vlaneseq
        %v1745 = vshrl.u32 %v1744, 7
        %v1746 = vsub.s32 0, %v1745
        %v1747 = vrot.slane %v1739, %v1746
        %v1749 = vsub.f32 %v1575, %v1747
        %v1750 = vsub.f32 %v1578, %v1747
        %v1751 = vsub.f32 %v1583, %v1747
        %v1752 = vsub.f32 %v1586, %v1747
        %v1753 = vsub.f32 %v1591, %v1747
        %v1754 = vsub.f32 %v1594, %v1747
        %v1755 = vsub.f32 %v1599, %v1747
        %v1756 = vsub.f32 %v1602, %v1747
        %v1757 = vsub.f32 %v1607, %v1747
        %v1758 = vsub.f32 %v1610, %v1747
        %v1759 = vsub.f32 %v1615, %v1747
        %v1760 = vsub.f32 %v1618, %v1747
        %v1761 = vsub.f32 %v1623, %v1747
        %v1762 = vsub.f32 %v1626, %v1747
        %v1763 = vsub.f32 %v1631, %v1747
        %v1764 = vsub.f32 %v1634, %v1747
        %v1765 = vsub.f32 %v1639, %v1747
        %v1766 = vsub.f32 %v1642, %v1747
        %v1767 = vsub.f32 %v1647, %v1747
        %v1768 = vsub.f32 %v1650, %v1747
        %v1769 = vsub.f32 %v1655, %v1747
        %v1770 = vsub.f32 %v1658, %v1747
        %v1771 = vsub.f32 %v1663, %v1747
        %v1772 = vsub.f32 %v1666, %v1747
        %v1773 = vsub.f32 %v1671, %v1747
        %v1774 = vsub.f32 %v1674, %v1747
        %v1775 = vsub.f32 %v1679, %v1747
        %v1776 = vsub.f32 %v1682, %v1747
        %v1777 = vsub.f32 %v1687, %v1747
        %v1778 = vsub.f32 %v1690, %v1747
        %v1779 = vsub.f32 %v1695, %v1747
        %v1780 = vsub.f32 %v1698, %v1747
        %v1781 = vmul.f32 %v1749, 1.442695
        %v1782 = vpow.pop %v1781
        %v1783 = vmul.f32 %v1750, 1.442695
        %v1784 = vpow.pop %v1783
        %v1785 = vmul.f32 %v1751, 1.442695
        %v1786 = vpow.pop %v1785
        %v1787 = vmul.f32 %v1752, 1.442695
        %v1788 = vpow.pop %v1787
        %v1789 = vmul.f32 %v1753, 1.442695
        %v1790 = vpow.pop %v1789
        %v1791 = vmul.f32 %v1754, 1.442695
        %v1792 = vpow.pop %v1791
        %v1793 = vmul.f32 %v1755, 1.442695
        %v1794 = vpow.pop %v1793
        %v1795 = vmul.f32 %v1756, 1.442695
        %v1796 = vpow.pop %v1795
        %v1797 = vmul.f32 %v1757, 1.442695
        %v1798 = vpow.pop %v1797
        %v1799 = vmul.f32 %v1758, 1.442695
        %v1800 = vpow.pop %v1799
        %v1801 = vmul.f32 %v1759, 1.442695
        %v1802 = vpow.pop %v1801
        %v1803 = vmul.f32 %v1760, 1.442695
        %v1804 = vpow.pop %v1803
        %v1805 = vmul.f32 %v1761, 1.442695
        %v1806 = vpow.pop %v1805
        %v1807 = vmul.f32 %v1762, 1.442695
        %v1808 = vpow.pop %v1807
        %v1809 = vmul.f32 %v1763, 1.442695
        %v1810 = vpow.pop %v1809
        %v1811 = vmul.f32 %v1764, 1.442695
        %v1812 = vpow.pop %v1811
        %v1813 = vmul.f32 %v1765, 1.442695
        %v1814 = vpow.pop %v1813
        %v1815 = vmul.f32 %v1766, 1.442695
        %v1816 = vpow.pop %v1815
        %v1817 = vmul.f32 %v1767, 1.442695
        %v1818 = vpow.pop %v1817
        %v1819 = vmul.f32 %v1768, 1.442695
        %v1820 = vpow.pop %v1819
        %v1821 = vmul.f32 %v1769, 1.442695
        %v1822 = vpow.pop %v1821
        %v1823 = vmul.f32 %v1770, 1.442695
        %v1824 = vpow.pop %v1823
        %v1825 = vmul.f32 %v1771, 1.442695
        %v1826 = vpow.pop %v1825
        %v1827 = vmul.f32 %v1772, 1.442695
        %v1828 = vpow.pop %v1827
        %v1829 = vmul.f32 %v1773, 1.442695
        %v1830 = vpow.pop %v1829
        %v1831 = vmul.f32 %v1774, 1.442695
        %v1832 = vpow.pop %v1831
        %v1833 = vmul.f32 %v1775, 1.442695
        %v1834 = vpow.pop %v1833
        %v1835 = vmul.f32 %v1776, 1.442695
        %v1836 = vpow.pop %v1835
        %v1837 = vmul.f32 %v1777, 1.442695
        %v1838 = vpow.pop %v1837
        %v1839 = vmul.f32 %v1778, 1.442695
        %v1840 = vpow.pop %v1839
        %v1841 = vmul.f32 %v1779, 1.442695
        %v1842 = vpow.pop %v1841
        %v1843 = vmul.f32 %v1780, 1.442695
        %v1844 = vpow.pop %v1843
        %v1845 = vld [vmem:[#allocation3] sm:$0x1]
        %v1846 = vmul.f32 %v1742, %v1845
        %v1847 = vadd.f32 %v1782, %v1784
        %v1848 = vadd.f32 %v1847, %v1786
        %v1849 = vadd.f32 %v1848, %v1788
        %v1850 = vadd.f32 %v1849, %v1790
        %v1851 = vadd.f32 %v1850, %v1792
        %v1852 = vadd.f32 %v1851, %v1794
        %v1853 = vadd.f32 %v1852, %v1796
        %v1854 = vadd.f32 %v1853, %v1798
        %v1855 = vadd.f32 %v1854, %v1800
        %v1856 = vadd.f32 %v1855, %v1802
        %v1857 = vadd.f32 %v1856, %v1804
        %v1858 = vadd.f32 %v1857, %v1806
        %v1859 = vadd.f32 %v1858, %v1808
        %v1860 = vadd.f32 %v1859, %v1810
        %v1861 = vadd.f32 %v1860, %v1812
        %v1862 = vadd.f32 %v1861, %v1814
        %v1863 = vadd.f32 %v1862, %v1816
        %v1864 = vadd.f32 %v1863, %v1818
        %v1865 = vadd.f32 %v1864, %v1820
        %v1866 = vadd.f32 %v1865, %v1822
        %v1867 = vadd.f32 %v1866, %v1824
        %v1868 = vadd.f32 %v1867, %v1826
        %v1869 = vadd.f32 %v1868, %v1828
        %v1870 = vadd.f32 %v1869, %v1830
        %v1871 = vadd.f32 %v1870, %v1832
        %v1872 = vadd.f32 %v1871, %v1834
        %v1873 = vadd.f32 %v1872, %v1836
        %v1874 = vadd.f32 %v1873, %v1838
        %v1875 = vadd.f32 %v1874, %v1840
        %v1876 = vadd.f32 %v1875, %v1842
        %v1877 = vadd.f32 %v1876, %v1844
        %v1878 = vrot.slane %v1877, 4
        %v1879 = vadd.f32 %v1877, %v1878
        %v1880 = vrot.slane %v1879, 2
        %v1881 = vadd.f32 %v1879, %v1880
        %v1882 = vrot.slane %v1881, 1
        %v1883 = vadd.f32 %v1881, %v1882
        %v1884 = vadd.f32 %v1846, %v1883
        %1885 = vst [vmem:[#allocation3] sm:$0x1] %v1884
        %v1886 = vld [vmem:[%s365] sm:$0xff]
        %v1887 = vld [vmem:[%s365 + $0x8] sm:$0xff]
        %v1888 = vpack.c.bf16 %v1886, %v1886
        %v1889 = vpack.c.bf16 %v1887, %v1887
        %v1890 = vpack.c.bf16 %v1784, %v1782
        %v1891 = vpack.c.bf16 %v1788, %v1786
        %v1892 = vpack.c.bf16 %v1792, %v1790
        %v1893 = vpack.c.bf16 %v1796, %v1794
        %v1894 = vpack.c.bf16 %v1800, %v1798
        %v1895 = vpack.c.bf16 %v1804, %v1802
        %v1896 = vpack.c.bf16 %v1808, %v1806
        %v1897 = vpack.c.bf16 %v1812, %v1810
        %v1898 = vpack.c.bf16 %v1816, %v1814
        %v1899 = vpack.c.bf16 %v1820, %v1818
        %v1900 = vpack.c.bf16 %v1824, %v1822
        %v1901 = vpack.c.bf16 %v1828, %v1826
        %v1902 = vpack.c.bf16 %v1832, %v1830
        %v1903 = vpack.c.bf16 %v1836, %v1834
        %v1904 = vpack.c.bf16 %v1840, %v1838
        %v1905 = vpack.c.bf16 %v1844, %v1842
        %1906 = vmatprep.subr.bf16.mxu0 0
        %1907 = vmatpush1.bf16.msra.mxu0 %v1890
        %1908 = vmatprep.subr.bf16.mxu0 0
        %1909 = vmatpush1.bf16.msra.mxu0 %v1891
        %1910 = vmatprep.subr.bf16.mxu0 0
        %1911 = vmatpush1.bf16.msra.mxu0 %v1892
        %1912 = vmatprep.subr.bf16.mxu0 0
        %1913 = vmatpush1.bf16.msra.mxu0 %v1893
        %1914 = vmatprep.subr.bf16.mxu0 0
        %1915 = vmatpush1.bf16.msra.mxu0 %v1894
        %1916 = vmatprep.subr.bf16.mxu0 0
        %1917 = vmatpush1.bf16.msra.mxu0 %v1895
        %1918 = vmatprep.subr.bf16.mxu0 0
        %1919 = vmatpush1.bf16.msra.mxu0 %v1896
        %1920 = vmatprep.subr.bf16.mxu0 0
        %1921 = vmatpush1.bf16.msra.mxu0 %v1897
        %1922 = vmatprep.subr.bf16.mxu0 0
        %1923 = vmatpush1.bf16.msra.mxu0 %v1898
        %1924 = vmatprep.subr.bf16.mxu0 0
        %1925 = vmatpush1.bf16.msra.mxu0 %v1899
        %1926 = vmatprep.subr.bf16.mxu0 0
        %1927 = vmatpush1.bf16.msra.mxu0 %v1900
        %1928 = vmatprep.subr.bf16.mxu0 0
        %1929 = vmatpush1.bf16.msra.mxu0 %v1901
        %1930 = vmatprep.subr.bf16.mxu0 0
        %1931 = vmatpush1.bf16.msra.mxu0 %v1902
        %1932 = vmatprep.subr.bf16.mxu0 0
        %1933 = vmatpush1.bf16.msra.mxu0 %v1903
        %1934 = vmatprep.subr.bf16.mxu0 0
        %1935 = vmatpush1.bf16.msra.mxu0 %v1904
        %1936 = vmatprep.subr.bf16.mxu0 0
        %1937 = vmatpush1.bf16.msra.mxu0 %v1905
        %1938 = vmatprep.mubr.bf16.mxu0 %v1889
        %1939 = vmatmul.mubr.bf16.gmra.mrb[0].mxu0 %v1888
        %v1940 = vpop.f32.mrb[0].mxu0
        %v1941 = vadd.f32 0.0, %v1940
        %v1942 = vpop.f32.mrb[0].mxu0
        %v1943 = vpop.f32.mrb[0].mxu0
        %v1944 = vpop.f32.mrb[0].mxu0
        %1945 = vdwg.mxu0
        %v1946 = vld [vmem:[#allocation4] sm:$0xff]
        %v1948 = vlaneseq
        %v1949 = vshrl.u32 %v1948, 7
        %v1950 = vsub.s32 0, %v1949
        %v1951 = vrot.slane %v1742, %v1950
        %v1953 = vmul.f32 %v1951, %v1946
        %v1954 = vadd.f32 %v1953, %v1941
        %1955 = vst [vmem:[#allocation4] sm:$0xff] %v1954
        %1956 = vst [vmem:[#allocation2] sm:$0x1] %v1739
        // Predicated region
        $region53: #{tpu_custom_call.1} parent=47 // pred_check
          %p1957 = pneg %p368
        $region54: #{tpu_custom_call.1} parent=47 // pred_check_branch
          %1959 = sbr.rel (%p1957) target = $region56
        $region55: #{tpu_custom_call.1} parent=47 // pred_region
          %v1960 = vld [vmem:[#allocation3] sm:$0x1]
          %v1961 = vrcp.pop %v1960
          %v1962 = vld [vmem:[#allocation4] sm:$0xff]
          %v1964 = vlaneseq
          %v1965 = vshrl.u32 %v1964, 7
          %v1966 = vsub.s32 0, %v1965
          %v1967 = vrot.slane %v1961, %v1966
          %v1969 = vmul.f32 %v1962, %v1967
          %v1970 = vlaneseq
          %v1971 = vshrl.u32 %v1970, 7
          %vm1972 = vcmp.eq.s32.totalorder %v1971, 2
          %v1973 = vld [vmem:[#allocation2] sm:$0x1]
          %v1975 = vlaneseq
          %v1976 = vshrl.u32 %v1975, 7
          %v1977 = vsub.s32 0, %v1976
          %v1978 = vrot.slane %v1973, %v1977
          %v1980 = vsel %vm1972, %v1978, %v1969
          %1981 = vst [vmem:[%s342] sm:$0xff] %v1980
        $region56: #{tpu_custom_call.1} parent=47 // pred_fallthru
          _
        %s1982 = sand.u32 %s216, 1
        %s1983 = scalar_lea.sflag [#allocation7], %s1982
        %s1984 = sand.u32 %s216, 1
        %s1985 = smul.addr %s1984, 8
        %s1986 = scalar_lea.vmem [#allocation6], %s1985
        // Predicated region
        $region57: #{tpu_custom_call.1} parent=47 // pred_check
          %p1987 = pneg %p226
        $region58: #{tpu_custom_call.1} parent=47 // pred_check_branch
          %1989 = sbr.rel (%p1987) target = $region60
        $region59: #{tpu_custom_call.1} parent=47 // pred_region
          %s1991 = ssub.s32 128, 128
          %1992 = vsyncadd %s1983, %s1991
          %s1993 = smul.addr %s26, 2
          %s1994 = sadd.s32 %s27, %s1993
          %s1995 = smul.addr %s1994, 128
          %s1996 = scalar_lea.hbm %s7, %s1995
          %s1998 = sshll.u32 %s1986, 4
          %s1999 = int_to_ptr.vmem [resolvable:$true] %s1998
          %2001 = dma.vmem_to_hbm [thread:$0]  %s1999, 128, %s1996, %s1983
        $region60: #{tpu_custom_call.1} parent=47 // pred_fallthru
          _
      $region48: #{tpu_custom_call.1} parent=5 // pred_fallthru
        _
      %p2002 = scmp.le.s32.totalorder 2, %s16
      // Predicated region
      $region61: #{tpu_custom_call.1} parent=5 // pred_check
        %p2003 = pneg %p2002
      $region62: #{tpu_custom_call.1} parent=5 // pred_check_branch
        %2005 = sbr.rel (%p2003) target = $region64
      $region63: #{tpu_custom_call.1} parent=5 // pred_region
        %s2006 = ssub.s32 %s16, 2
        // Predicated region
        $region65: #{tpu_custom_call.1} parent=63 // pred_check
          %p2007 = pneg %p232
        $region66: #{tpu_custom_call.1} parent=63 // pred_check_branch
          %2009 = sbr.rel (%p2007) target = $region68
        $region67: #{tpu_custom_call.1} parent=63 // pred_region
          %s2010 = sand.u32 %s217, 1
          %s2011 = scalar_lea.sflag [#allocation7], %s2010
          %s2012 = sand.u32 %s217, 1
          %s2013 = smul.addr %s2012, 8
          %s2014 = scalar_lea.vmem [#allocation6], %s2013
          %2015 = dma.done %s2011, 128
        $region68: #{tpu_custom_call.1} parent=63 // pred_fallthru
          _
      $region64: #{tpu_custom_call.1} parent=5 // pred_fallthru
        _
    $region6: #{tpu_custom_call.1} parent=1 // loop_footer
      %s20 = sadd.s32 1, %s16
    $region7: #{tpu_custom_call.1} parent=1 // loop_footer_branch
      %15 = sbr.rel target = $region3
    $region8: #{tpu_custom_call.1} parent=1 // loop_exit
      _
    %2016 = vsyncpa [#allocation7], 1
    %s2017 = scalar_lea.sflag [#allocation7], 1
    %2018 = vsyncpa %s2017, 1

</llo_original>
